<compile_context>
chip_gen: v5e
topology: v5e:2x2
jax: 0.10.0
libtpu: 0.0.40
codegen_flags: <defaults>
</compile_context>

<pallas_src>
import jax
import jax.numpy as jnp
from jax.experimental import pallas as pl
from jax.experimental.pallas import tpu as pltpu

NEG_SLOPE = 0.01                 # nn.LeakyReLU() default (chosen activation_func)
CONV_K = 800                     # Conv1d kernel size hardcoded in the module
_HI = jax.lax.Precision.HIGHEST  # host-side f32 composition + pure-JAX reference


def _round_up(n, m):
    return ((n + m - 1) // m) * m


# ---------------------------------------------------------------------------
# Pallas kernel: grid over layers, one bf16 MXU matmul + LeakyReLU per step.
# ---------------------------------------------------------------------------
def _fused_layer_kernel(x_ref, s_ref, out_ref, res_ref):
    l = pl.program_id(0)

    @pl.when(l == 0)
    def _():
        res_ref[...] = x_ref[...]                         # load initial activation

    z = jnp.dot(res_ref[...].astype(jnp.bfloat16), s_ref[0],
                preferred_element_type=jnp.float32)       # (B, CLp) @ (CLp, CLp)
    res = jnp.where(z >= 0, z, NEG_SLOPE * z)             # LeakyReLU
    res_ref[...] = res
    out_ref[...] = res                                    # out block index invariant


# ---------------------------------------------------------------------------
# Host-side operator construction (DFT bases, Toeplitz conv, full fusion).
# Build ONCE per weight set (inference) and reuse across calls.
# ---------------------------------------------------------------------------
def _dft_bases(L, M):
    t = jnp.arange(L, dtype=jnp.float32)
    m = jnp.arange(M, dtype=jnp.float32)
    ang_f = 2.0 * jnp.pi * t[:, None] * m[None, :] / L           # (L, M)
    Fc = jnp.cos(ang_f)                                          # Re rfft
    Fs = -jnp.sin(ang_f)                                         # Im rfft
    mi = jnp.arange(M)
    dc_or_nyq = (mi == 0) | ((L % 2 == 0) & (mi == L // 2))      # irfft ignores Im here
    cm = jnp.where(dc_or_nyq, 1.0, 2.0).astype(jnp.float32)
    ang_i = 2.0 * jnp.pi * m[:, None] * t[None, :] / L           # (M, L)
    Ic = (cm[:, None] / L) * jnp.cos(ang_i)
    Is = jnp.where(dc_or_nyq[:, None], 0.0, -(cm[:, None] / L) * jnp.sin(ang_i))
    return Fc, Fs, Ic, Is


def build_fused_operators(spec_wr, spec_wi, conv_w, conv_b, L):
    """Pre-compose the NA active layers into (NA, CLp, CLp) bf16 operators.

    spec_wr/spec_wi: (NA, C, C, M); conv_w: (NA, C_out, C_in, K); conv_b: (NA, C).
    Bias is folded via a constant-1 lane at flattened column CL.
    """
    NA, C, _, M = spec_wr.shape
    K = conv_w.shape[-1]
    assert M <= L // 2 + 1, "modes must not exceed rfft length"
    CL, CM = C * L, C * M
    CLp = _round_up(CL + 1, 256)            # +1 lane reserved for the bias constant
    CONST = CL

    # --- spectral path: truncated rfft -> complex channel mix -> truncated irfft
    Fc, Fs, Ic, Is = _dft_bases(L, M)
    eyeC = jnp.eye(C, dtype=jnp.float32)
    FcFs = jnp.concatenate([jnp.kron(eyeC, Fc), jnp.kron(eyeC, Fs)], axis=1)   # (CL, 2CM)
    IcIs = jnp.concatenate([jnp.kron(eyeC, Ic), jnp.kron(eyeC, Is)], axis=0)   # (2CM, CL)

    eyeM = jnp.eye(M, dtype=jnp.float32)
    Wr = jnp.einsum('liom,mn->limon', spec_wr, eyeM).reshape(NA, CM, CM)
    Wi = jnp.einsum('liom,mn->limon', spec_wi, eyeM).reshape(NA, CM, CM)
    Wspec = jnp.concatenate(
        [jnp.concatenate([Wr, Wi], axis=2),
         jnp.concatenate([-Wi, Wr], axis=2)], axis=1)                          # (NA, 2CM, 2CM)

    mix = jnp.einsum('lpm,mq->lpq', Wspec, IcIs, precision=_HI)                # (NA, 2CM, CL)
    S = jnp.einsum('pm,lmq->lpq', FcFs, mix, precision=_HI)                    # (NA, CL, CL)

    # --- Toeplitz expansion of Conv1d(kernel=K, padding='same'):
    # PyTorch pads (left, right) = ((K-1)//2, K//2) for stride=1, dilation=1.
    pad_l = (K - 1) // 2
    s_idx = jnp.arange(L)[:, None]
    j_idx = jnp.arange(L)[None, :]
    k_idx = pad_l + s_idx - j_idx                                              # (L, L)
    valid = ((k_idx >= 0) & (k_idx < K)).astype(jnp.float32)
    k_safe = jnp.clip(k_idx, 0, K - 1)
    toe = conv_w[:, :, :, k_safe] * valid[None, None, None]                    # (NA, O, I, L, L)
    Wt = jnp.transpose(toe, (0, 2, 3, 1, 4)).reshape(NA, CL, CL)               # rows (i,s), cols (o,j)
    S = S + Wt

    # --- pad to lane-dense square, fold bias via the constant-1 lane ---------
    S = jnp.pad(S, ((0, 0), (0, CLp - CL), (0, CLp - CL)))                     # zero pad => inert lanes
    bias_row = jnp.repeat(conv_b, L, axis=-1)                                  # (NA, CL), index o*L+j
    S = S.at[:, CONST, :CL].set(bias_row)
    S = S.at[:, CONST, CONST].set(1.0)                                         # const lane maps to itself
    return S.astype(jnp.bfloat16)


# ---------------------------------------------------------------------------
# Apply path (jitted): pad/flatten activation, run the layer-streaming kernel.
# ---------------------------------------------------------------------------
@jax.jit
def apply_fourier_layers(x, S):
    # x: (B, C, L) float32 (PyTorch NCL); S: (NA, CLp, CLp) bf16 fused operators
    B, C, L = x.shape
    NA, CLp, _ = S.shape
    CL = C * L

    x2 = jnp.pad(x.reshape(B, CL).astype(jnp.float32), ((0, 0), (0, CLp - CL)))
    x2 = x2.at[:, CL].set(1.0)                            # constant bias lane

    out = pl.pallas_call(
        _fused_layer_kernel,
        out_shape=jax.ShapeDtypeStruct((B, CLp), jnp.float32),
        grid_spec=pltpu.PrefetchScalarGridSpec(
            num_scalar_prefetch=0,
            grid=(NA,),                                   # stream layers; next-layer DMA hides behind matmul
            in_specs=[
                pl.BlockSpec((B, CLp), lambda l: (0, 0)),            # activation (tiny, resident)
                pl.BlockSpec((1, CLp, CLp), lambda l: (l, 0, 0)),    # per-layer fused operator
            ],
            out_specs=pl.BlockSpec((B, CLp), lambda l: (0, 0)),      # invariant block -> single writeback
            scratch_shapes=[pltpu.VMEM((B, CLp), jnp.float32)],      # `res` carry across layers
        ),
        compiler_params=pltpu.CompilerParams(
            dimension_semantics=("arbitrary",),           # layer axis is a sequential carry
            vmem_limit_bytes=64 * 1024 * 1024),
        cost_estimate=pl.CostEstimate(
            flops=2 * NA * B * CLp * CLp,
            transcendentals=0,
            bytes_accessed=NA * CLp * CLp * 2 + 2 * B * CLp * 4),
    )(x2, S)

    return out[:, :CL].reshape(B, C, L)


def fourier_layers_forward(x, spec_wr, spec_wi, conv_w, conv_b):
    """Convenience one-shot wrapper (builds operators then applies them)."""
    NL = spec_wr.shape[0]
    if NL <= 1:
        return x          # PyTorch loop never updates `res` when num_layers == 1
    NA = NL - 1           # the last layer's result is discarded by the reference module
    L = x.shape[-1]
    S = build_fused_operators(spec_wr[:NA], spec_wi[:NA], conv_w[:NA], conv_b[:NA], L)
    return apply_fourier_layers(x, S)


# ---------------------------------------------------------------------------
# Pure-JAX reference (real FFTs + lax.conv) for a sanity check.
# ---------------------------------------------------------------------------
def reference_forward(x, spec_wr, spec_wi, conv_w, conv_b):
    NL, C, _, M = spec_wr.shape
    B, _, L = x.shape
    K = conv_w.shape[-1]
    pad_l = (K - 1) // 2
    res = x
    for l in range(NL):
        w = (spec_wr[l] + 1j * spec_wi[l]).astype(jnp.complex64)
        xf = jnp.fft.rfft(res, axis=2)
        yf = jnp.einsum('bix,iox->box', xf[:, :, :M], w)
        out_f = jnp.zeros((B, C, L // 2 + 1), dtype=jnp.complex64).at[:, :, :M].set(yf)
        spec = jnp.fft.irfft(out_f, n=L, axis=2)
        conv = jax.lax.conv_general_dilated(
            res, conv_w[l], window_strides=(1,),
            padding=[(pad_l, K - 1 - pad_l)],
            dimension_numbers=('NCH', 'OIH', 'NCH'),
            precision=_HI) + conv_b[l][None, :, None]
        if l < NL - 1:
            z = spec + conv
            res = jnp.where(z >= 0, z, NEG_SLOPE * z)
    return res


if __name__ == "__main__":
    B, width, L, modes, num_layers = 2, 21, 32, 6, 3

    key = jax.random.PRNGKey(0)
    k1, k2, k3, k4, k5 = jax.random.split(key, 5)

    # SpectralConv weights: scale * rand(in, out, modes) complex  (scale = 1/in_channels)
    scale = 1.0 / width
    spec_wr = scale * jax.random.uniform(k1, (num_layers, width, width, modes), dtype=jnp.float32)
    spec_wi = scale * jax.random.uniform(k2, (num_layers, width, width, modes), dtype=jnp.float32)

    # Conv1d(width, width, 800) weights/bias (PyTorch-style uniform init, synthetic)
    bound = (1.0 / (width * CONV_K)) ** 0.5
    conv_w = jax.random.uniform(k3, (num_layers, width, width, CONV_K),
                                minval=-bound, maxval=bound, dtype=jnp.float32)
    conv_b = jax.random.uniform(k4, (num_layers, width),
                                minval=-bound, maxval=bound, dtype=jnp.float32)

    x = jax.random.normal(k5, (B, width, L), dtype=jnp.float32)

    # Build the fused per-layer operators ONCE (hoisted out of the per-call path),
    # then run the Pallas kernel on the activations.
    NA = num_layers - 1
    S = jax.block_until_ready(
        build_fused_operators(spec_wr[:NA], spec_wi[:NA], conv_w[:NA], conv_b[:NA], L))
    out = jax.block_until_ready(apply_fourier_layers(x, S))

    ref = jax.block_until_ready(reference_forward(x, spec_wr, spec_wi, conv_w, conv_b))
    max_err = float(jnp.max(jnp.abs(out - ref)))
    assert out.shape == (B, width, L) and max_err < 5e-2, f"mismatch vs reference: {max_err}"

    print("KERNEL_OK")
</pallas_src>

<mosaic_0001>
module attributes {stable_mosaic.version = 11 : i64} {
  func.func @_fused_layer_kernel(%arg0: i32, %arg1: memref<2x768xf32, #tpu.memory_space<vmem>>, %arg2: memref<1x768x768xbf16, #tpu.memory_space<vmem>>, %arg3: memref<2x768xf32, #tpu.memory_space<vmem>>, %arg4: memref<2x768xf32, #tpu.memory_space<vmem>>) attributes {dimension_semantics = [#tpu.dimension_semantics<arbitrary>], iteration_bounds = array<i64: 2>, scalar_prefetch = 0 : i64, scratch_operands = 1 : i64, tpu.core_type = #tpu.core_type<tc>, window_params = [{pipeline_mode = #tpu.pipeline_mode<synchronous>, transform_indices = @transform_0, window_bounds = array<i64: 2, 768>}, {transform_indices = @transform_1, window_bounds = array<i64: 1, 768, 768>}, {pipeline_mode = #tpu.pipeline_mode<synchronous>, transform_indices = @transform_2, window_bounds = array<i64: 2, 768>}]} {
    %c0_i32 = arith.constant 0 : i32
    %0 = arith.cmpi eq, %arg0, %c0_i32 : i32
    %1 = arith.extui %0 : i1 to i32
    %c0_i32_0 = arith.constant 0 : i32
    %2 = arith.cmpi ne, %1, %c0_i32_0 : i32
    scf.if %2 {
      %c0_11 = arith.constant 0 : index
      %c0_12 = arith.constant 0 : index
      %15 = vector.load %arg1[%c0_11, %c0_12] : memref<2x768xf32, #tpu.memory_space<vmem>>, vector<2x768xf32>
      %c0_13 = arith.constant 0 : index
      %c0_14 = arith.constant 0 : index
      %16 = vector.load %arg4[%c0_13, %c0_14] : memref<2x768xf32, #tpu.memory_space<vmem>>, vector<2x768xf32>
      tpu.vector_store %arg4[%c0_13, %c0_14], %15 {strides = array<i32>} : memref<2x768xf32, #tpu.memory_space<vmem>>, vector<2x768xf32>,
    } else {
    }
    %c0 = arith.constant 0 : index
    %c0_1 = arith.constant 0 : index
    %3 = vector.load %arg4[%c0, %c0_1] : memref<2x768xf32, #tpu.memory_space<vmem>>, vector<2x768xf32>
    %4 = arith.truncf %3 : vector<2x768xf32> to vector<2x768xbf16>
    %c0_2 = arith.constant 0 : index
    %c0_3 = arith.constant 0 : index
    %c0_4 = arith.constant 0 : index
    %5 = vector.load %arg2[%c0_2, %c0_3, %c0_4] : memref<1x768x768xbf16, #tpu.memory_space<vmem>>, vector<1x768x768xbf16>
    %6 = vector.shape_cast %5 : vector<1x768x768xbf16> to vector<768x768xbf16>
    %cst = arith.constant dense<0.000000e+00> : vector<2x768xf32>
    %7 = tpu.matmul %4, %6, %cst {dimension_numbers = #tpu.dot_dimension_numbers<[1], [0], [0], [1], [0, 0, 1, 1], [], []>} : vector<2x768xbf16>, vector<768x768xbf16>, vector<2x768xf32> -> vector<2x768xf32>
    %cst_5 = arith.constant 0.000000e+00 : f32
    %8 = vector.broadcast %cst_5 : f32 to vector<2x768xf32>
    %9 = arith.cmpf oge, %7, %8 : vector<2x768xf32>
    %cst_6 = arith.constant 0.00999999977 : f32
    %10 = vector.broadcast %cst_6 : f32 to vector<2x768xf32>
    %11 = arith.mulf %10, %7 : vector<2x768xf32>
    %12 = arith.select %9, %7, %11 : vector<2x768xi1>, vector<2x768xf32>
    %c0_7 = arith.constant 0 : index
    %c0_8 = arith.constant 0 : index
    %13 = vector.load %arg4[%c0_7, %c0_8] : memref<2x768xf32, #tpu.memory_space<vmem>>, vector<2x768xf32>
    tpu.vector_store %arg4[%c0_7, %c0_8], %12 {strides = array<i32>} : memref<2x768xf32, #tpu.memory_space<vmem>>, vector<2x768xf32>,
    %c0_9 = arith.constant 0 : index
    %c0_10 = arith.constant 0 : index
    %14 = vector.load %arg3[%c0_9, %c0_10] : memref<2x768xf32, #tpu.memory_space<vmem>>, vector<2x768xf32>
    tpu.vector_store %arg3[%c0_9, %c0_10], %12 {strides = array<i32>} : memref<2x768xf32, #tpu.memory_space<vmem>>, vector<2x768xf32>,
    return
  }
  func.func @transform_0(%arg0: i32) -> (i32, i32) {
    %c0_i32 = arith.constant 0 : i32
    %c0_i32_0 = arith.constant 0 : i32
    %c0_i32_1 = arith.constant 0 : i32
    return %c0_i32, %c0_i32_0 : i32, i32
  }
  func.func @transform_1(%arg0: i32) -> (i32, i32, i32) {
    %c0_i32 = arith.constant 0 : i32
    %c0_i32_0 = arith.constant 0 : i32
    %c0_i32_1 = arith.constant 0 : i32
    return %arg0, %c0_i32, %c0_i32_0 : i32, i32, i32
  }
  func.func @transform_2(%arg0: i32) -> (i32, i32) {
    %c0_i32 = arith.constant 0 : i32
    %c0_i32_0 = arith.constant 0 : i32
    %c0_i32_1 = arith.constant 0 : i32
    return %c0_i32, %c0_i32_0 : i32, i32
  }
}

</mosaic_0001>

<llo_original>
// kernel: apply_fourier_layers.1
$region0: #{apply_fourier_layers.1}
  #allocation0 [shape = 'u32[]', space=smem, size = 0x4, offset = 0x4, fixed_abs, tag = 'smem constant byte address 0x4 - core index']
  #allocation1 [shape = 'u32[72,128]{1,0:T(1,128)}', space=vmem, size = 0x9000, scoped, tag = 'internal scratch']
  #allocation2 [shape = 'f32[2,768]{1,0:T(2,128)}', space=vmem, size = 0x1800, scoped, tag = 'scratch operand']
  %s0 = inlined_call_operand.vmem [shape: f32[2,768], index: 0, kind: input, shape index: {}]
  %s1 = inlined_call_operand.hbm [shape: bf16[2,768,768], index: 1, kind: input, shape index: {}]
  %s2 = inlined_call_operand.vmem [shape: f32[2,768], index: 2, kind: output, shape index: {}]
  %s3 = sld [smem:[#allocation0]]
  $region49: #{apply_fourier_layers.1} parent=0
    _
  %s5 = ssub.s32 1, %s3
  %s6 = scalar_select 0, %s5, %s3
  $region1: #{apply_fourier_layers.1} parent=0
    #allocation3 [shape = 'u8[2359296]{0}', space=vmem, size = 0x240000, scoped, tag = 'input window, operand 1']
    #allocation4 [shape = 's32[2]{0}', space=sflag, size = 0x8, scoped, tag = 'scoped memory for apply_fourier_layers.1']
    %7 = vsyncpa [#allocation4], 0
    %s8 = scalar_lea.sflag [#allocation4], 1
    %9 = vsyncpa %s8, 0
    loop: start=0, step=1, limit=4
    $region2: #{apply_fourier_layers.1} parent=1 // loop_pre_header
      _
    $region3: #{apply_fourier_layers.1} parent=1 // loop_header
      %s11 = sphi 0, %s15
      %p12 = scmp.ge.s32.totalorder %s11, 4
      %s19 = sphi 0, %s19
      %s21 = sphi 0, %s19
      %s22 = sphi 0, %s21
      %s36 = sphi 0, %s22
      %s42 = sphi 0, %s44
      %s45 = sphi 0, %s42
      %s46 = sphi 0, %s45
      %s62 = sphi 0, %s46
      %s66 = sphi 0, %s66
      %s68 = sphi 0, %s66
      %s69 = sphi 0, %s68
      %s83 = sphi 0, %s69
    $region4: #{apply_fourier_layers.1} parent=1 // loop_header_branch
      %14 = sbr.rel (%p12) target = $region8
    $region5: #{apply_fourier_layers.1} parent=1 // loop_body
      %s16 = ssub.s32 %s11, 1
      %s17 = ssub.s32 %s11, 2
      %s18 = sadd.s32 %s11, 1
      %s20 = sadd.s32 %s19, 1
      %p23 = scmp.eq.s32.totalorder %s11, 1
      %p24 = scmp.ne.s32.totalorder %s19, %s21
      %p25 = scmp.eq.s32.totalorder %s11, 0
      %p26 = por %p24, %p25
      %p27 = scmp.ne.s32.totalorder %s19, %s21
      %p28 = scmp.eq.s32.totalorder %s16, 1
      %p29 = por %p27, %p28
      %p30 = scmp.ne.s32.totalorder %s21, %s22
      %p31 = scmp.eq.s32.totalorder %s16, 0
      %p32 = por %p30, %p31
      %p33 = scmp.ne.s32.totalorder %s21, %s22
      %p34 = scmp.eq.s32.totalorder %s17, 1
      %p35 = por %p33, %p34
      %p37 = scmp.ne.s32.totalorder %s22, %s36
      %p38 = scmp.eq.s32.totalorder %s17, 0
      %p39 = por %p37, %p38
      %s40 = ssub.s32 %s11, %s18
      %p41 = scmp.eq.s32.totalorder %s40, 0
      %s43 = sadd.s32 %s42, 1
      %s44 = scalar_select %p41, %s42, %s43
      %p47 = pneg %p41
      %p48 = scmp.eq.s32.totalorder %s11, 1
      %p49 = por %p47, %p48
      %p50 = scmp.ne.s32.totalorder %s42, %s45
      %p51 = scmp.eq.s32.totalorder %s11, 0
      %p52 = por %p50, %p51
      %p53 = scmp.ne.s32.totalorder %s42, %s45
      %p54 = scmp.eq.s32.totalorder %s16, 1
      %p55 = por %p53, %p54
      %p56 = scmp.ne.s32.totalorder %s45, %s46
      %p57 = scmp.eq.s32.totalorder %s16, 0
      %p58 = por %p56, %p57
      %p59 = scmp.ne.s32.totalorder %s45, %s46
      %p60 = scmp.eq.s32.totalorder %s17, 1
      %p61 = por %p59, %p60
      %p63 = scmp.ne.s32.totalorder %s46, %s62
      %p64 = scmp.eq.s32.totalorder %s17, 0
      %p65 = por %p63, %p64
      %s67 = sadd.s32 %s66, 1
      %p70 = scmp.eq.s32.totalorder %s11, 1
      %p71 = scmp.ne.s32.totalorder %s66, %s68
      %p72 = scmp.eq.s32.totalorder %s11, 0
      %p73 = por %p71, %p72
      %p74 = scmp.ne.s32.totalorder %s66, %s68
      %p75 = scmp.eq.s32.totalorder %s16, 1
      %p76 = por %p74, %p75
      %p77 = scmp.ne.s32.totalorder %s68, %s69
      %p78 = scmp.eq.s32.totalorder %s16, 0
      %p79 = por %p77, %p78
      %p80 = scmp.ne.s32.totalorder %s68, %s69
      %p81 = scmp.eq.s32.totalorder %s17, 1
      %p82 = por %p80, %p81
      %p84 = scmp.ne.s32.totalorder %s69, %s83
      %p85 = scmp.eq.s32.totalorder %s17, 0
      %p86 = por %p84, %p85
      %p87 = scmp.le.s32.totalorder 1, %s11
      %p88 = scmp.lt.s32.totalorder %s11, 3
      %p89 = pnand %p87, %p88
      %p90 = pneg %p89
      // Predicated region
      $region9: #{apply_fourier_layers.1} parent=5 // pred_check
        _
      $region10: #{apply_fourier_layers.1} parent=5 // pred_check_branch
        %92 = sbr.rel (%p89) target = $region12
      $region11: #{apply_fourier_layers.1} parent=5 // pred_region
        %s93 = ssub.s32 %s11, 1
        // Predicated region
        $region13: #{apply_fourier_layers.1} parent=11 // pred_check
          %p94 = pneg %p32
        $region14: #{apply_fourier_layers.1} parent=11 // pred_check_branch
          %96 = sbr.rel (%p94) target = $region16
        $region15: #{apply_fourier_layers.1} parent=11 // pred_region
          _
        $region16: #{apply_fourier_layers.1} parent=11 // pred_fallthru
          _
      $region12: #{apply_fourier_layers.1} parent=5 // pred_fallthru
        _
      %p97 = scmp.lt.s32.totalorder %s11, 2
      // Predicated region
      $region17: #{apply_fourier_layers.1} parent=5 // pred_check
        %p98 = pneg %p97
      $region18: #{apply_fourier_layers.1} parent=5 // pred_check_branch
        %100 = sbr.rel (%p98) target = $region20
      $region19: #{apply_fourier_layers.1} parent=5 // pred_region
        // Predicated region
        $region21: #{apply_fourier_layers.1} parent=19 // pred_check
          %p101 = pneg %p52
        $region22: #{apply_fourier_layers.1} parent=19 // pred_check_branch
          %103 = sbr.rel (%p101) target = $region24
        $region23: #{apply_fourier_layers.1} parent=19 // pred_region
          %s104 = sand.u32 %s42, 1
          %s105 = scalar_lea.sflag [#allocation4], %s104
          %s106 = sand.u32 %s42, 1
          %s107 = smul.addr %s106, 2304
          %s108 = scalar_lea.vmem [#allocation3], %s107
          %110 = vsyncadd %s105, 0
          %s111 = smul.addr %s11, 576
          %s112 = smul.addr %s111, 4
          %s113 = scalar_lea.hbm %s1, %s112
          %s114 = sshll.u32 %s113, 4
          %s115 = int_to_ptr.hbm [resolvable:$true] %s114
          %s116 = sshll.u32 %s108, 4
          %s117 = int_to_ptr.vmem [resolvable:$true] %s116
          %122 = dma.hbm_to_vmem [thread:$0]  %s115, 36864, %s117, %s105, 384, 384, 24
        $region24: #{apply_fourier_layers.1} parent=19 // pred_fallthru
          _
      $region20: #{apply_fourier_layers.1} parent=5 // pred_fallthru
        _
      %p123 = scmp.le.s32.totalorder 1, %s11
      %p124 = scmp.lt.s32.totalorder %s11, 3
      %p125 = pnand %p123, %p124
      %p126 = pneg %p125
      // Predicated region
      $region25: #{apply_fourier_layers.1} parent=5 // pred_check
        _
      $region26: #{apply_fourier_layers.1} parent=5 // pred_check_branch
        %128 = sbr.rel (%p125) target = $region28
      $region27: #{apply_fourier_layers.1} parent=5 // pred_region
        %s129 = ssub.s32 %s11, 1
        %s130 = sand.u32 %s45, 1
        %s131 = scalar_lea.sflag [#allocation4], %s130
        %s132 = sand.u32 %s45, 1
        %s133 = smul.addr %s132, 2304
        %s134 = scalar_lea.vmem [#allocation3], %s133
        // Predicated region
        $region29: #{apply_fourier_layers.1} parent=27 // pred_check
          %p135 = pneg %p58
        $region30: #{apply_fourier_layers.1} parent=27 // pred_check_branch
          %137 = sbr.rel (%p135) target = $region32
        $region31: #{apply_fourier_layers.1} parent=27 // pred_region
          %139 = dma.done %s131, 36864
        $region32: #{apply_fourier_layers.1} parent=27 // pred_fallthru
          _
        %p140 = pneg %p32
        %p141 = pneg %p29
        %s142 = sand.u32 %s45, 1
        %s143 = scalar_lea.sflag [#allocation4], %s142
        %s144 = sand.u32 %s45, 1
        %s145 = smul.addr %s144, 2304
        %s146 = scalar_lea.vmem [#allocation3], %s145
        %p147 = pneg %p58
        %p148 = pneg %p55
        %p149 = pneg %p79
        %p150 = pneg %p76
        %p151 = scmp.eq.s32.totalorder %s16, 0
        // Predicated region
        $region33: #{apply_fourier_layers.1} parent=27 // pred_check
          %p152 = pneg %p151
        $region34: #{apply_fourier_layers.1} parent=27 // pred_check_branch
          %154 = sbr.rel (%p152) target = $region36
        $region35: #{apply_fourier_layers.1} parent=27 // pred_region
          %v155 = vld [vmem:[%s0] sm:$0xff]
          %v156 = vld [vmem:[%s0 + $0x8] sm:$0xf]
          %157 = vst [vmem:[#allocation2] sm:$0xff] %v155
          %158 = vst [vmem:[#allocation2 + $0x8] sm:$0xf] %v156
        $region36: #{apply_fourier_layers.1} parent=27 // pred_fallthru
          _
        %v159 = vld [vmem:[#allocation2] sm:$0xff]
        %v160 = vld [vmem:[#allocation2 + $0x8] sm:$0xf]
        %163 = vst [vmem:[#allocation1] ss:$4 sm:$0xff] %v159
        %s164 = scalar_lea.vmem [#allocation1], 32
        %165 = vst [vmem:[%s164] ss:$4 sm:$0xff] %v160
        %v166 = vld.sshfl [vmem:[#allocation1] sm:$0xff pattern:$0x73625140]
        %v167 = vld.sshfl [vmem:[#allocation1 + $0x8] sm:$0xff pattern:$0x73625140]
        %v168 = vld.sshfl [vmem:[#allocation1 + $0x10] sm:$0xff pattern:$0x73625140]
        %v169 = vld.sshfl [vmem:[#allocation1 + $0x18] sm:$0xff pattern:$0x73625140]
        %v170 = vld.sshfl [vmem:[#allocation1 + $0x20] sm:$0xff pattern:$0x73625140]
        %v171 = vld.sshfl [vmem:[#allocation1 + $0x28] sm:$0xff pattern:$0x73625140]
        %v178 = vpack.c.bf16 %v166, %v166
        %v179 = vpack.c.bf16 %v167, %v167
        %v180 = vpack.c.bf16 %v168, %v168
        %v181 = vpack.c.bf16 %v169, %v169
        %v182 = vpack.c.bf16 %v170, %v170
        %v183 = vpack.c.bf16 %v171, %v171
        %v184 = vld [vmem:[%s134] sm:$0xff]
        %v185 = vld [vmem:[%s134 + $0x8] sm:$0xff]
        %v186 = vld [vmem:[%s134 + $0x10] sm:$0xff]
        %v187 = vld [vmem:[%s134 + $0x18] sm:$0xff]
        %v188 = vld [vmem:[%s134 + $0x20] sm:$0xff]
        %v189 = vld [vmem:[%s134 + $0x28] sm:$0xff]
        %v190 = vld [vmem:[%s134 + $0x30] sm:$0xff]
        %v191 = vld [vmem:[%s134 + $0x38] sm:$0xff]
        %v192 = vld [vmem:[%s134 + $0x40] sm:$0xff]
        %v193 = vld [vmem:[%s134 + $0x48] sm:$0xff]
        %v194 = vld [vmem:[%s134 + $0x50] sm:$0xff]
        %v195 = vld [vmem:[%s134 + $0x58] sm:$0xff]
        %v196 = vld [vmem:[%s134 + $0x60] sm:$0xff]
        %v197 = vld [vmem:[%s134 + $0x68] sm:$0xff]
        %v198 = vld [vmem:[%s134 + $0x70] sm:$0xff]
        %v199 = vld [vmem:[%s134 + $0x78] sm:$0xff]
        %v200 = vld [vmem:[%s134 + $0x80] sm:$0xff]
        %v201 = vld [vmem:[%s134 + $0x88] sm:$0xff]
        %v202 = vld [vmem:[%s134 + $0x90] sm:$0xff]
        %v203 = vld [vmem:[%s134 + $0x98] sm:$0xff]
        %v204 = vld [vmem:[%s134 + $0xa0] sm:$0xff]
        %v205 = vld [vmem:[%s134 + $0xa8] sm:$0xff]
        %v206 = vld [vmem:[%s134 + $0xb0] sm:$0xff]
        %v207 = vld [vmem:[%s134 + $0xb8] sm:$0xff]
        %v208 = vld [vmem:[%s134 + $0xc0] sm:$0xff]
        %v209 = vld [vmem:[%s134 + $0xc8] sm:$0xff]
        %v210 = vld [vmem:[%s134 + $0xd0] sm:$0xff]
        %v211 = vld [vmem:[%s134 + $0xd8] sm:$0xff]
        %v212 = vld [vmem:[%s134 + $0xe0] sm:$0xff]
        %v213 = vld [vmem:[%s134 + $0xe8] sm:$0xff]
        %v214 = vld [vmem:[%s134 + $0xf0] sm:$0xff]
        %v215 = vld [vmem:[%s134 + $0xf8] sm:$0xff]
        %v216 = vld [vmem:[%s134 + $0x100] sm:$0xff]
        %v217 = vld [vmem:[%s134 + $0x108] sm:$0xff]
        %v218 = vld [vmem:[%s134 + $0x110] sm:$0xff]
        %v219 = vld [vmem:[%s134 + $0x118] sm:$0xff]
        %v220 = vld [vmem:[%s134 + $0x120] sm:$0xff]
        %v221 = vld [vmem:[%s134 + $0x128] sm:$0xff]
        %v222 = vld [vmem:[%s134 + $0x130] sm:$0xff]
        %v223 = vld [vmem:[%s134 + $0x138] sm:$0xff]
        %v224 = vld [vmem:[%s134 + $0x140] sm:$0xff]
        %v225 = vld [vmem:[%s134 + $0x148] sm:$0xff]
        %v226 = vld [vmem:[%s134 + $0x150] sm:$0xff]
        %v227 = vld [vmem:[%s134 + $0x158] sm:$0xff]
        %v228 = vld [vmem:[%s134 + $0x160] sm:$0xff]
        %v229 = vld [vmem:[%s134 + $0x168] sm:$0xff]
        %v230 = vld [vmem:[%s134 + $0x170] sm:$0xff]
        %v231 = vld [vmem:[%s134 + $0x178] sm:$0xff]
        %v232 = vld [vmem:[%s134 + $0x180] sm:$0xff]
        %v233 = vld [vmem:[%s134 + $0x188] sm:$0xff]
        %v234 = vld [vmem:[%s134 + $0x190] sm:$0xff]
        %v235 = vld [vmem:[%s134 + $0x198] sm:$0xff]
        %v236 = vld [vmem:[%s134 + $0x1a0] sm:$0xff]
        %v237 = vld [vmem:[%s134 + $0x1a8] sm:$0xff]
        %v238 = vld [vmem:[%s134 + $0x1b0] sm:$0xff]
        %v239 = vld [vmem:[%s134 + $0x1b8] sm:$0xff]
        %v240 = vld [vmem:[%s134 + $0x1c0] sm:$0xff]
        %v241 = vld [vmem:[%s134 + $0x1c8] sm:$0xff]
        %v242 = vld [vmem:[%s134 + $0x1d0] sm:$0xff]
        %v243 = vld [vmem:[%s134 + $0x1d8] sm:$0xff]
        %v244 = vld [vmem:[%s134 + $0x1e0] sm:$0xff]
        %v245 = vld [vmem:[%s134 + $0x1e8] sm:$0xff]
        %v246 = vld [vmem:[%s134 + $0x1f0] sm:$0xff]
        %v247 = vld [vmem:[%s134 + $0x1f8] sm:$0xff]
        %v248 = vld [vmem:[%s134 + $0x200] sm:$0xff]
        %v249 = vld [vmem:[%s134 + $0x208] sm:$0xff]
        %v250 = vld [vmem:[%s134 + $0x210] sm:$0xff]
        %v251 = vld [vmem:[%s134 + $0x218] sm:$0xff]
        %v252 = vld [vmem:[%s134 + $0x220] sm:$0xff]
        %v253 = vld [vmem:[%s134 + $0x228] sm:$0xff]
        %v254 = vld [vmem:[%s134 + $0x230] sm:$0xff]
        %v255 = vld [vmem:[%s134 + $0x238] sm:$0xff]
        %v256 = vld [vmem:[%s134 + $0x240] sm:$0xff]
        %v257 = vld [vmem:[%s134 + $0x248] sm:$0xff]
        %v258 = vld [vmem:[%s134 + $0x250] sm:$0xff]
        %v259 = vld [vmem:[%s134 + $0x258] sm:$0xff]
        %v260 = vld [vmem:[%s134 + $0x260] sm:$0xff]
        %v261 = vld [vmem:[%s134 + $0x268] sm:$0xff]
        %v262 = vld [vmem:[%s134 + $0x270] sm:$0xff]
        %v263 = vld [vmem:[%s134 + $0x278] sm:$0xff]
        %v264 = vld [vmem:[%s134 + $0x280] sm:$0xff]
        %v265 = vld [vmem:[%s134 + $0x288] sm:$0xff]
        %v266 = vld [vmem:[%s134 + $0x290] sm:$0xff]
        %v267 = vld [vmem:[%s134 + $0x298] sm:$0xff]
        %v268 = vld [vmem:[%s134 + $0x2a0] sm:$0xff]
        %v269 = vld [vmem:[%s134 + $0x2a8] sm:$0xff]
        %v270 = vld [vmem:[%s134 + $0x2b0] sm:$0xff]
        %v271 = vld [vmem:[%s134 + $0x2b8] sm:$0xff]
        %v272 = vld [vmem:[%s134 + $0x2c0] sm:$0xff]
        %v273 = vld [vmem:[%s134 + $0x2c8] sm:$0xff]
        %v274 = vld [vmem:[%s134 + $0x2d0] sm:$0xff]
        %v275 = vld [vmem:[%s134 + $0x2d8] sm:$0xff]
        %v276 = vld [vmem:[%s134 + $0x2e0] sm:$0xff]
        %v277 = vld [vmem:[%s134 + $0x2e8] sm:$0xff]
        %v278 = vld [vmem:[%s134 + $0x2f0] sm:$0xff]
        %v279 = vld [vmem:[%s134 + $0x2f8] sm:$0xff]
        %v280 = vld [vmem:[%s134 + $0x300] sm:$0xff]
        %v281 = vld [vmem:[%s134 + $0x308] sm:$0xff]
        %v282 = vld [vmem:[%s134 + $0x310] sm:$0xff]
        %v283 = vld [vmem:[%s134 + $0x318] sm:$0xff]
        %v284 = vld [vmem:[%s134 + $0x320] sm:$0xff]
        %v285 = vld [vmem:[%s134 + $0x328] sm:$0xff]
        %v286 = vld [vmem:[%s134 + $0x330] sm:$0xff]
        %v287 = vld [vmem:[%s134 + $0x338] sm:$0xff]
        %v288 = vld [vmem:[%s134 + $0x340] sm:$0xff]
        %v289 = vld [vmem:[%s134 + $0x348] sm:$0xff]
        %v290 = vld [vmem:[%s134 + $0x350] sm:$0xff]
        %v291 = vld [vmem:[%s134 + $0x358] sm:$0xff]
        %v292 = vld [vmem:[%s134 + $0x360] sm:$0xff]
        %v293 = vld [vmem:[%s134 + $0x368] sm:$0xff]
        %v294 = vld [vmem:[%s134 + $0x370] sm:$0xff]
        %v295 = vld [vmem:[%s134 + $0x378] sm:$0xff]
        %v296 = vld [vmem:[%s134 + $0x380] sm:$0xff]
        %v297 = vld [vmem:[%s134 + $0x388] sm:$0xff]
        %v298 = vld [vmem:[%s134 + $0x390] sm:$0xff]
        %v299 = vld [vmem:[%s134 + $0x398] sm:$0xff]
        %v300 = vld [vmem:[%s134 + $0x3a0] sm:$0xff]
        %v301 = vld [vmem:[%s134 + $0x3a8] sm:$0xff]
        %v302 = vld [vmem:[%s134 + $0x3b0] sm:$0xff]
        %v303 = vld [vmem:[%s134 + $0x3b8] sm:$0xff]
        %v304 = vld [vmem:[%s134 + $0x3c0] sm:$0xff]
        %v305 = vld [vmem:[%s134 + $0x3c8] sm:$0xff]
        %v306 = vld [vmem:[%s134 + $0x3d0] sm:$0xff]
        %v307 = vld [vmem:[%s134 + $0x3d8] sm:$0xff]
        %v308 = vld [vmem:[%s134 + $0x3e0] sm:$0xff]
        %v309 = vld [vmem:[%s134 + $0x3e8] sm:$0xff]
        %v310 = vld [vmem:[%s134 + $0x3f0] sm:$0xff]
        %v311 = vld [vmem:[%s134 + $0x3f8] sm:$0xff]
        %v312 = vld [vmem:[%s134 + $0x400] sm:$0xff]
        %v313 = vld [vmem:[%s134 + $0x408] sm:$0xff]
        %v314 = vld [vmem:[%s134 + $0x410] sm:$0xff]
        %v315 = vld [vmem:[%s134 + $0x418] sm:$0xff]
        %v316 = vld [vmem:[%s134 + $0x420] sm:$0xff]
        %v317 = vld [vmem:[%s134 + $0x428] sm:$0xff]
        %v318 = vld [vmem:[%s134 + $0x430] sm:$0xff]
        %v319 = vld [vmem:[%s134 + $0x438] sm:$0xff]
        %v320 = vld [vmem:[%s134 + $0x440] sm:$0xff]
        %v321 = vld [vmem:[%s134 + $0x448] sm:$0xff]
        %v322 = vld [vmem:[%s134 + $0x450] sm:$0xff]
        %v323 = vld [vmem:[%s134 + $0x458] sm:$0xff]
        %v324 = vld [vmem:[%s134 + $0x460] sm:$0xff]
        %v325 = vld [vmem:[%s134 + $0x468] sm:$0xff]
        %v326 = vld [vmem:[%s134 + $0x470] sm:$0xff]
        %v327 = vld [vmem:[%s134 + $0x478] sm:$0xff]
        %v328 = vld [vmem:[%s134 + $0x480] sm:$0xff]
        %v329 = vld [vmem:[%s134 + $0x488] sm:$0xff]
        %v330 = vld [vmem:[%s134 + $0x490] sm:$0xff]
        %v331 = vld [vmem:[%s134 + $0x498] sm:$0xff]
        %v332 = vld [vmem:[%s134 + $0x4a0] sm:$0xff]
        %v333 = vld [vmem:[%s134 + $0x4a8] sm:$0xff]
        %v334 = vld [vmem:[%s134 + $0x4b0] sm:$0xff]
        %v335 = vld [vmem:[%s134 + $0x4b8] sm:$0xff]
        %v336 = vld [vmem:[%s134 + $0x4c0] sm:$0xff]
        %v337 = vld [vmem:[%s134 + $0x4c8] sm:$0xff]
        %v338 = vld [vmem:[%s134 + $0x4d0] sm:$0xff]
        %v339 = vld [vmem:[%s134 + $0x4d8] sm:$0xff]
        %v340 = vld [vmem:[%s134 + $0x4e0] sm:$0xff]
        %v341 = vld [vmem:[%s134 + $0x4e8] sm:$0xff]
        %v342 = vld [vmem:[%s134 + $0x4f0] sm:$0xff]
        %v343 = vld [vmem:[%s134 + $0x4f8] sm:$0xff]
        %v344 = vld [vmem:[%s134 + $0x500] sm:$0xff]
        %v345 = vld [vmem:[%s134 + $0x508] sm:$0xff]
        %v346 = vld [vmem:[%s134 + $0x510] sm:$0xff]
        %v347 = vld [vmem:[%s134 + $0x518] sm:$0xff]
        %v348 = vld [vmem:[%s134 + $0x520] sm:$0xff]
        %v349 = vld [vmem:[%s134 + $0x528] sm:$0xff]
        %v350 = vld [vmem:[%s134 + $0x530] sm:$0xff]
        %v351 = vld [vmem:[%s134 + $0x538] sm:$0xff]
        %v352 = vld [vmem:[%s134 + $0x540] sm:$0xff]
        %v353 = vld [vmem:[%s134 + $0x548] sm:$0xff]
        %v354 = vld [vmem:[%s134 + $0x550] sm:$0xff]
        %v355 = vld [vmem:[%s134 + $0x558] sm:$0xff]
        %v356 = vld [vmem:[%s134 + $0x560] sm:$0xff]
        %v357 = vld [vmem:[%s134 + $0x568] sm:$0xff]
        %v358 = vld [vmem:[%s134 + $0x570] sm:$0xff]
        %v359 = vld [vmem:[%s134 + $0x578] sm:$0xff]
        %v360 = vld [vmem:[%s134 + $0x580] sm:$0xff]
        %v361 = vld [vmem:[%s134 + $0x588] sm:$0xff]
        %v362 = vld [vmem:[%s134 + $0x590] sm:$0xff]
        %v363 = vld [vmem:[%s134 + $0x598] sm:$0xff]
        %v364 = vld [vmem:[%s134 + $0x5a0] sm:$0xff]
        %v365 = vld [vmem:[%s134 + $0x5a8] sm:$0xff]
        %v366 = vld [vmem:[%s134 + $0x5b0] sm:$0xff]
        %v367 = vld [vmem:[%s134 + $0x5b8] sm:$0xff]
        %v368 = vld [vmem:[%s134 + $0x5c0] sm:$0xff]
        %v369 = vld [vmem:[%s134 + $0x5c8] sm:$0xff]
        %v370 = vld [vmem:[%s134 + $0x5d0] sm:$0xff]
        %v371 = vld [vmem:[%s134 + $0x5d8] sm:$0xff]
        %v372 = vld [vmem:[%s134 + $0x5e0] sm:$0xff]
        %v373 = vld [vmem:[%s134 + $0x5e8] sm:$0xff]
        %v374 = vld [vmem:[%s134 + $0x5f0] sm:$0xff]
        %v375 = vld [vmem:[%s134 + $0x5f8] sm:$0xff]
        %v376 = vld [vmem:[%s134 + $0x600] sm:$0xff]
        %v377 = vld [vmem:[%s134 + $0x608] sm:$0xff]
        %v378 = vld [vmem:[%s134 + $0x610] sm:$0xff]
        %v379 = vld [vmem:[%s134 + $0x618] sm:$0xff]
        %v380 = vld [vmem:[%s134 + $0x620] sm:$0xff]
        %v381 = vld [vmem:[%s134 + $0x628] sm:$0xff]
        %v382 = vld [vmem:[%s134 + $0x630] sm:$0xff]
        %v383 = vld [vmem:[%s134 + $0x638] sm:$0xff]
        %v384 = vld [vmem:[%s134 + $0x640] sm:$0xff]
        %v385 = vld [vmem:[%s134 + $0x648] sm:$0xff]
        %v386 = vld [vmem:[%s134 + $0x650] sm:$0xff]
        %v387 = vld [vmem:[%s134 + $0x658] sm:$0xff]
        %v388 = vld [vmem:[%s134 + $0x660] sm:$0xff]
        %v389 = vld [vmem:[%s134 + $0x668] sm:$0xff]
        %v390 = vld [vmem:[%s134 + $0x670] sm:$0xff]
        %v391 = vld [vmem:[%s134 + $0x678] sm:$0xff]
        %v392 = vld [vmem:[%s134 + $0x680] sm:$0xff]
        %v393 = vld [vmem:[%s134 + $0x688] sm:$0xff]
        %v394 = vld [vmem:[%s134 + $0x690] sm:$0xff]
        %v395 = vld [vmem:[%s134 + $0x698] sm:$0xff]
        %v396 = vld [vmem:[%s134 + $0x6a0] sm:$0xff]
        %v397 = vld [vmem:[%s134 + $0x6a8] sm:$0xff]
        %v398 = vld [vmem:[%s134 + $0x6b0] sm:$0xff]
        %v399 = vld [vmem:[%s134 + $0x6b8] sm:$0xff]
        %v400 = vld [vmem:[%s134 + $0x6c0] sm:$0xff]
        %v401 = vld [vmem:[%s134 + $0x6c8] sm:$0xff]
        %v402 = vld [vmem:[%s134 + $0x6d0] sm:$0xff]
        %v403 = vld [vmem:[%s134 + $0x6d8] sm:$0xff]
        %v404 = vld [vmem:[%s134 + $0x6e0] sm:$0xff]
        %v405 = vld [vmem:[%s134 + $0x6e8] sm:$0xff]
        %v406 = vld [vmem:[%s134 + $0x6f0] sm:$0xff]
        %v407 = vld [vmem:[%s134 + $0x6f8] sm:$0xff]
        %v408 = vld [vmem:[%s134 + $0x700] sm:$0xff]
        %v409 = vld [vmem:[%s134 + $0x708] sm:$0xff]
        %v410 = vld [vmem:[%s134 + $0x710] sm:$0xff]
        %v411 = vld [vmem:[%s134 + $0x718] sm:$0xff]
        %v412 = vld [vmem:[%s134 + $0x720] sm:$0xff]
        %v413 = vld [vmem:[%s134 + $0x728] sm:$0xff]
        %v414 = vld [vmem:[%s134 + $0x730] sm:$0xff]
        %v415 = vld [vmem:[%s134 + $0x738] sm:$0xff]
        %v416 = vld [vmem:[%s134 + $0x740] sm:$0xff]
        %v417 = vld [vmem:[%s134 + $0x748] sm:$0xff]
        %v418 = vld [vmem:[%s134 + $0x750] sm:$0xff]
        %v419 = vld [vmem:[%s134 + $0x758] sm:$0xff]
        %v420 = vld [vmem:[%s134 + $0x760] sm:$0xff]
        %v421 = vld [vmem:[%s134 + $0x768] sm:$0xff]
        %v422 = vld [vmem:[%s134 + $0x770] sm:$0xff]
        %v423 = vld [vmem:[%s134 + $0x778] sm:$0xff]
        %v424 = vld [vmem:[%s134 + $0x780] sm:$0xff]
        %v425 = vld [vmem:[%s134 + $0x788] sm:$0xff]
        %v426 = vld [vmem:[%s134 + $0x790] sm:$0xff]
        %v427 = vld [vmem:[%s134 + $0x798] sm:$0xff]
        %v428 = vld [vmem:[%s134 + $0x7a0] sm:$0xff]
        %v429 = vld [vmem:[%s134 + $0x7a8] sm:$0xff]
        %v430 = vld [vmem:[%s134 + $0x7b0] sm:$0xff]
        %v431 = vld [vmem:[%s134 + $0x7b8] sm:$0xff]
        %v432 = vld [vmem:[%s134 + $0x7c0] sm:$0xff]
        %v433 = vld [vmem:[%s134 + $0x7c8] sm:$0xff]
        %v434 = vld [vmem:[%s134 + $0x7d0] sm:$0xff]
        %v435 = vld [vmem:[%s134 + $0x7d8] sm:$0xff]
        %v436 = vld [vmem:[%s134 + $0x7e0] sm:$0xff]
        %v437 = vld [vmem:[%s134 + $0x7e8] sm:$0xff]
        %v438 = vld [vmem:[%s134 + $0x7f0] sm:$0xff]
        %v439 = vld [vmem:[%s134 + $0x7f8] sm:$0xff]
        %v440 = vld [vmem:[%s134 + $0x800] sm:$0xff]
        %v441 = vld [vmem:[%s134 + $0x808] sm:$0xff]
        %v442 = vld [vmem:[%s134 + $0x810] sm:$0xff]
        %v443 = vld [vmem:[%s134 + $0x818] sm:$0xff]
        %v444 = vld [vmem:[%s134 + $0x820] sm:$0xff]
        %v445 = vld [vmem:[%s134 + $0x828] sm:$0xff]
        %v446 = vld [vmem:[%s134 + $0x830] sm:$0xff]
        %v447 = vld [vmem:[%s134 + $0x838] sm:$0xff]
        %v448 = vld [vmem:[%s134 + $0x840] sm:$0xff]
        %v449 = vld [vmem:[%s134 + $0x848] sm:$0xff]
        %v450 = vld [vmem:[%s134 + $0x850] sm:$0xff]
        %v451 = vld [vmem:[%s134 + $0x858] sm:$0xff]
        %v452 = vld [vmem:[%s134 + $0x860] sm:$0xff]
        %v453 = vld [vmem:[%s134 + $0x868] sm:$0xff]
        %v454 = vld [vmem:[%s134 + $0x870] sm:$0xff]
        %v455 = vld [vmem:[%s134 + $0x878] sm:$0xff]
        %v456 = vld [vmem:[%s134 + $0x880] sm:$0xff]
        %v457 = vld [vmem:[%s134 + $0x888] sm:$0xff]
        %v458 = vld [vmem:[%s134 + $0x890] sm:$0xff]
        %v459 = vld [vmem:[%s134 + $0x898] sm:$0xff]
        %v460 = vld [vmem:[%s134 + $0x8a0] sm:$0xff]
        %v461 = vld [vmem:[%s134 + $0x8a8] sm:$0xff]
        %v462 = vld [vmem:[%s134 + $0x8b0] sm:$0xff]
        %v463 = vld [vmem:[%s134 + $0x8b8] sm:$0xff]
        %v464 = vld [vmem:[%s134 + $0x8c0] sm:$0xff]
        %v465 = vld [vmem:[%s134 + $0x8c8] sm:$0xff]
        %v466 = vld [vmem:[%s134 + $0x8d0] sm:$0xff]
        %v467 = vld [vmem:[%s134 + $0x8d8] sm:$0xff]
        %v468 = vld [vmem:[%s134 + $0x8e0] sm:$0xff]
        %v469 = vld [vmem:[%s134 + $0x8e8] sm:$0xff]
        %v470 = vld [vmem:[%s134 + $0x8f0] sm:$0xff]
        %v471 = vld [vmem:[%s134 + $0x8f8] sm:$0xff]
        %v760 = vunpack.c.l.b16 %v184
        %v761 = vunpack.c.h.b16 %v184
        %v762 = vunpack.c.l.b16 %v185
        %v763 = vunpack.c.h.b16 %v185
        %v764 = vunpack.c.l.b16 %v186
        %v765 = vunpack.c.h.b16 %v186
        %v766 = vunpack.c.l.b16 %v187
        %v767 = vunpack.c.h.b16 %v187
        %v768 = vunpack.c.l.b16 %v188
        %v769 = vunpack.c.h.b16 %v188
        %v770 = vunpack.c.l.b16 %v189
        %v771 = vunpack.c.h.b16 %v189
        %v772 = vunpack.c.l.b16 %v190
        %v773 = vunpack.c.h.b16 %v190
        %v774 = vunpack.c.l.b16 %v191
        %v775 = vunpack.c.h.b16 %v191
        %v776 = vunpack.c.l.b16 %v192
        %v777 = vunpack.c.h.b16 %v192
        %v778 = vunpack.c.l.b16 %v193
        %v779 = vunpack.c.h.b16 %v193
        %v780 = vunpack.c.l.b16 %v194
        %v781 = vunpack.c.h.b16 %v194
        %v782 = vunpack.c.l.b16 %v195
        %v783 = vunpack.c.h.b16 %v195
        %v784 = vunpack.c.l.b16 %v196
        %v785 = vunpack.c.h.b16 %v196
        %v786 = vunpack.c.l.b16 %v197
        %v787 = vunpack.c.h.b16 %v197
        %v788 = vunpack.c.l.b16 %v198
        %v789 = vunpack.c.h.b16 %v198
        %v790 = vunpack.c.l.b16 %v199
        %v791 = vunpack.c.h.b16 %v199
        %v792 = vunpack.c.l.b16 %v200
        %v793 = vunpack.c.h.b16 %v200
        %v794 = vunpack.c.l.b16 %v201
        %v795 = vunpack.c.h.b16 %v201
        %v796 = vunpack.c.l.b16 %v202
        %v797 = vunpack.c.h.b16 %v202
        %v798 = vunpack.c.l.b16 %v203
        %v799 = vunpack.c.h.b16 %v203
        %v800 = vunpack.c.l.b16 %v204
        %v801 = vunpack.c.h.b16 %v204
        %v802 = vunpack.c.l.b16 %v205
        %v803 = vunpack.c.h.b16 %v205
        %v804 = vunpack.c.l.b16 %v206
        %v805 = vunpack.c.h.b16 %v206
        %v806 = vunpack.c.l.b16 %v207
        %v807 = vunpack.c.h.b16 %v207
        %v808 = vunpack.c.l.b16 %v208
        %v809 = vunpack.c.h.b16 %v208
        %v810 = vunpack.c.l.b16 %v209
        %v811 = vunpack.c.h.b16 %v209
        %v812 = vunpack.c.l.b16 %v210
        %v813 = vunpack.c.h.b16 %v210
        %v814 = vunpack.c.l.b16 %v211
        %v815 = vunpack.c.h.b16 %v211
        %v816 = vunpack.c.l.b16 %v212
        %v817 = vunpack.c.h.b16 %v212
        %v818 = vunpack.c.l.b16 %v213
        %v819 = vunpack.c.h.b16 %v213
        %v820 = vunpack.c.l.b16 %v214
        %v821 = vunpack.c.h.b16 %v214
        %v822 = vunpack.c.l.b16 %v215
        %v823 = vunpack.c.h.b16 %v215
        %v824 = vunpack.c.l.b16 %v216
        %v825 = vunpack.c.h.b16 %v216
        %v826 = vunpack.c.l.b16 %v217
        %v827 = vunpack.c.h.b16 %v217
        %v828 = vunpack.c.l.b16 %v218
        %v829 = vunpack.c.h.b16 %v218
        %v830 = vunpack.c.l.b16 %v219
        %v831 = vunpack.c.h.b16 %v219
        %v832 = vunpack.c.l.b16 %v220
        %v833 = vunpack.c.h.b16 %v220
        %v834 = vunpack.c.l.b16 %v221
        %v835 = vunpack.c.h.b16 %v221
        %v836 = vunpack.c.l.b16 %v222
        %v837 = vunpack.c.h.b16 %v222
        %v838 = vunpack.c.l.b16 %v223
        %v839 = vunpack.c.h.b16 %v223
        %v840 = vunpack.c.l.b16 %v224
        %v841 = vunpack.c.h.b16 %v224
        %v842 = vunpack.c.l.b16 %v225
        %v843 = vunpack.c.h.b16 %v225
        %v844 = vunpack.c.l.b16 %v226
        %v845 = vunpack.c.h.b16 %v226
        %v846 = vunpack.c.l.b16 %v227
        %v847 = vunpack.c.h.b16 %v227
        %v848 = vunpack.c.l.b16 %v228
        %v849 = vunpack.c.h.b16 %v228
        %v850 = vunpack.c.l.b16 %v229
        %v851 = vunpack.c.h.b16 %v229
        %v852 = vunpack.c.l.b16 %v230
        %v853 = vunpack.c.h.b16 %v230
        %v854 = vunpack.c.l.b16 %v231
        %v855 = vunpack.c.h.b16 %v231
        %v856 = vunpack.c.l.b16 %v232
        %v857 = vunpack.c.h.b16 %v232
        %v858 = vunpack.c.l.b16 %v233
        %v859 = vunpack.c.h.b16 %v233
        %v860 = vunpack.c.l.b16 %v234
        %v861 = vunpack.c.h.b16 %v234
        %v862 = vunpack.c.l.b16 %v235
        %v863 = vunpack.c.h.b16 %v235
        %v864 = vunpack.c.l.b16 %v236
        %v865 = vunpack.c.h.b16 %v236
        %v866 = vunpack.c.l.b16 %v237
        %v867 = vunpack.c.h.b16 %v237
        %v868 = vunpack.c.l.b16 %v238
        %v869 = vunpack.c.h.b16 %v238
        %v870 = vunpack.c.l.b16 %v239
        %v871 = vunpack.c.h.b16 %v239
        %v872 = vunpack.c.l.b16 %v240
        %v873 = vunpack.c.h.b16 %v240
        %v874 = vunpack.c.l.b16 %v241
        %v875 = vunpack.c.h.b16 %v241
        %v876 = vunpack.c.l.b16 %v242
        %v877 = vunpack.c.h.b16 %v242
        %v878 = vunpack.c.l.b16 %v243
        %v879 = vunpack.c.h.b16 %v243
        %v880 = vunpack.c.l.b16 %v244
        %v881 = vunpack.c.h.b16 %v244
        %v882 = vunpack.c.l.b16 %v245
        %v883 = vunpack.c.h.b16 %v245
        %v884 = vunpack.c.l.b16 %v246
        %v885 = vunpack.c.h.b16 %v246
        %v886 = vunpack.c.l.b16 %v247
        %v887 = vunpack.c.h.b16 %v247
        %v888 = vunpack.c.l.b16 %v248
        %v889 = vunpack.c.h.b16 %v248
        %v890 = vunpack.c.l.b16 %v249
        %v891 = vunpack.c.h.b16 %v249
        %v892 = vunpack.c.l.b16 %v250
        %v893 = vunpack.c.h.b16 %v250
        %v894 = vunpack.c.l.b16 %v251
        %v895 = vunpack.c.h.b16 %v251
        %v896 = vunpack.c.l.b16 %v252
        %v897 = vunpack.c.h.b16 %v252
        %v898 = vunpack.c.l.b16 %v253
        %v899 = vunpack.c.h.b16 %v253
        %v900 = vunpack.c.l.b16 %v254
        %v901 = vunpack.c.h.b16 %v254
        %v902 = vunpack.c.l.b16 %v255
        %v903 = vunpack.c.h.b16 %v255
        %v904 = vunpack.c.l.b16 %v256
        %v905 = vunpack.c.h.b16 %v256
        %v906 = vunpack.c.l.b16 %v257
        %v907 = vunpack.c.h.b16 %v257
        %v908 = vunpack.c.l.b16 %v258
        %v909 = vunpack.c.h.b16 %v258
        %v910 = vunpack.c.l.b16 %v259
        %v911 = vunpack.c.h.b16 %v259
        %v912 = vunpack.c.l.b16 %v260
        %v913 = vunpack.c.h.b16 %v260
        %v914 = vunpack.c.l.b16 %v261
        %v915 = vunpack.c.h.b16 %v261
        %v916 = vunpack.c.l.b16 %v262
        %v917 = vunpack.c.h.b16 %v262
        %v918 = vunpack.c.l.b16 %v263
        %v919 = vunpack.c.h.b16 %v263
        %v920 = vunpack.c.l.b16 %v264
        %v921 = vunpack.c.h.b16 %v264
        %v922 = vunpack.c.l.b16 %v265
        %v923 = vunpack.c.h.b16 %v265
        %v924 = vunpack.c.l.b16 %v266
        %v925 = vunpack.c.h.b16 %v266
        %v926 = vunpack.c.l.b16 %v267
        %v927 = vunpack.c.h.b16 %v267
        %v928 = vunpack.c.l.b16 %v268
        %v929 = vunpack.c.h.b16 %v268
        %v930 = vunpack.c.l.b16 %v269
        %v931 = vunpack.c.h.b16 %v269
        %v932 = vunpack.c.l.b16 %v270
        %v933 = vunpack.c.h.b16 %v270
        %v934 = vunpack.c.l.b16 %v271
        %v935 = vunpack.c.h.b16 %v271
        %v936 = vunpack.c.l.b16 %v272
        %v937 = vunpack.c.h.b16 %v272
        %v938 = vunpack.c.l.b16 %v273
        %v939 = vunpack.c.h.b16 %v273
        %v940 = vunpack.c.l.b16 %v274
        %v941 = vunpack.c.h.b16 %v274
        %v942 = vunpack.c.l.b16 %v275
        %v943 = vunpack.c.h.b16 %v275
        %v944 = vunpack.c.l.b16 %v276
        %v945 = vunpack.c.h.b16 %v276
        %v946 = vunpack.c.l.b16 %v277
        %v947 = vunpack.c.h.b16 %v277
        %v948 = vunpack.c.l.b16 %v278
        %v949 = vunpack.c.h.b16 %v278
        %v950 = vunpack.c.l.b16 %v279
        %v951 = vunpack.c.h.b16 %v279
        %v952 = vunpack.c.l.b16 %v280
        %v953 = vunpack.c.h.b16 %v280
        %v954 = vunpack.c.l.b16 %v281
        %v955 = vunpack.c.h.b16 %v281
        %v956 = vunpack.c.l.b16 %v282
        %v957 = vunpack.c.h.b16 %v282
        %v958 = vunpack.c.l.b16 %v283
        %v959 = vunpack.c.h.b16 %v283
        %v960 = vunpack.c.l.b16 %v284
        %v961 = vunpack.c.h.b16 %v284
        %v962 = vunpack.c.l.b16 %v285
        %v963 = vunpack.c.h.b16 %v285
        %v964 = vunpack.c.l.b16 %v286
        %v965 = vunpack.c.h.b16 %v286
        %v966 = vunpack.c.l.b16 %v287
        %v967 = vunpack.c.h.b16 %v287
        %v968 = vunpack.c.l.b16 %v288
        %v969 = vunpack.c.h.b16 %v288
        %v970 = vunpack.c.l.b16 %v289
        %v971 = vunpack.c.h.b16 %v289
        %v972 = vunpack.c.l.b16 %v290
        %v973 = vunpack.c.h.b16 %v290
        %v974 = vunpack.c.l.b16 %v291
        %v975 = vunpack.c.h.b16 %v291
        %v976 = vunpack.c.l.b16 %v292
        %v977 = vunpack.c.h.b16 %v292
        %v978 = vunpack.c.l.b16 %v293
        %v979 = vunpack.c.h.b16 %v293
        %v980 = vunpack.c.l.b16 %v294
        %v981 = vunpack.c.h.b16 %v294
        %v982 = vunpack.c.l.b16 %v295
        %v983 = vunpack.c.h.b16 %v295
        %v984 = vunpack.c.l.b16 %v296
        %v985 = vunpack.c.h.b16 %v296
        %v986 = vunpack.c.l.b16 %v297
        %v987 = vunpack.c.h.b16 %v297
        %v988 = vunpack.c.l.b16 %v298
        %v989 = vunpack.c.h.b16 %v298
        %v990 = vunpack.c.l.b16 %v299
        %v991 = vunpack.c.h.b16 %v299
        %v992 = vunpack.c.l.b16 %v300
        %v993 = vunpack.c.h.b16 %v300
        %v994 = vunpack.c.l.b16 %v301
        %v995 = vunpack.c.h.b16 %v301
        %v996 = vunpack.c.l.b16 %v302
        %v997 = vunpack.c.h.b16 %v302
        %v998 = vunpack.c.l.b16 %v303
        %v999 = vunpack.c.h.b16 %v303
        %v1000 = vunpack.c.l.b16 %v304
        %v1001 = vunpack.c.h.b16 %v304
        %v1002 = vunpack.c.l.b16 %v305
        %v1003 = vunpack.c.h.b16 %v305
        %v1004 = vunpack.c.l.b16 %v306
        %v1005 = vunpack.c.h.b16 %v306
        %v1006 = vunpack.c.l.b16 %v307
        %v1007 = vunpack.c.h.b16 %v307
        %v1008 = vunpack.c.l.b16 %v308
        %v1009 = vunpack.c.h.b16 %v308
        %v1010 = vunpack.c.l.b16 %v309
        %v1011 = vunpack.c.h.b16 %v309
        %v1012 = vunpack.c.l.b16 %v310
        %v1013 = vunpack.c.h.b16 %v310
        %v1014 = vunpack.c.l.b16 %v311
        %v1015 = vunpack.c.h.b16 %v311
        %v1016 = vunpack.c.l.b16 %v312
        %v1017 = vunpack.c.h.b16 %v312
        %v1018 = vunpack.c.l.b16 %v313
        %v1019 = vunpack.c.h.b16 %v313
        %v1020 = vunpack.c.l.b16 %v314
        %v1021 = vunpack.c.h.b16 %v314
        %v1022 = vunpack.c.l.b16 %v315
        %v1023 = vunpack.c.h.b16 %v315
        %v1024 = vunpack.c.l.b16 %v316
        %v1025 = vunpack.c.h.b16 %v316
        %v1026 = vunpack.c.l.b16 %v317
        %v1027 = vunpack.c.h.b16 %v317
        %v1028 = vunpack.c.l.b16 %v318
        %v1029 = vunpack.c.h.b16 %v318
        %v1030 = vunpack.c.l.b16 %v319
        %v1031 = vunpack.c.h.b16 %v319
        %v1032 = vunpack.c.l.b16 %v320
        %v1033 = vunpack.c.h.b16 %v320
        %v1034 = vunpack.c.l.b16 %v321
        %v1035 = vunpack.c.h.b16 %v321
        %v1036 = vunpack.c.l.b16 %v322
        %v1037 = vunpack.c.h.b16 %v322
        %v1038 = vunpack.c.l.b16 %v323
        %v1039 = vunpack.c.h.b16 %v323
        %v1040 = vunpack.c.l.b16 %v324
        %v1041 = vunpack.c.h.b16 %v324
        %v1042 = vunpack.c.l.b16 %v325
        %v1043 = vunpack.c.h.b16 %v325
        %v1044 = vunpack.c.l.b16 %v326
        %v1045 = vunpack.c.h.b16 %v326
        %v1046 = vunpack.c.l.b16 %v327
        %v1047 = vunpack.c.h.b16 %v327
        %v1048 = vunpack.c.l.b16 %v328
        %v1049 = vunpack.c.h.b16 %v328
        %v1050 = vunpack.c.l.b16 %v329
        %v1051 = vunpack.c.h.b16 %v329
        %v1052 = vunpack.c.l.b16 %v330
        %v1053 = vunpack.c.h.b16 %v330
        %v1054 = vunpack.c.l.b16 %v331
        %v1055 = vunpack.c.h.b16 %v331
        %v1056 = vunpack.c.l.b16 %v332
        %v1057 = vunpack.c.h.b16 %v332
        %v1058 = vunpack.c.l.b16 %v333
        %v1059 = vunpack.c.h.b16 %v333
        %v1060 = vunpack.c.l.b16 %v334
        %v1061 = vunpack.c.h.b16 %v334
        %v1062 = vunpack.c.l.b16 %v335
        %v1063 = vunpack.c.h.b16 %v335
        %v1064 = vunpack.c.l.b16 %v336
        %v1065 = vunpack.c.h.b16 %v336
        %v1066 = vunpack.c.l.b16 %v337
        %v1067 = vunpack.c.h.b16 %v337
        %v1068 = vunpack.c.l.b16 %v338
        %v1069 = vunpack.c.h.b16 %v338
        %v1070 = vunpack.c.l.b16 %v339
        %v1071 = vunpack.c.h.b16 %v339
        %v1072 = vunpack.c.l.b16 %v340
        %v1073 = vunpack.c.h.b16 %v340
        %v1074 = vunpack.c.l.b16 %v341
        %v1075 = vunpack.c.h.b16 %v341
        %v1076 = vunpack.c.l.b16 %v342
        %v1077 = vunpack.c.h.b16 %v342
        %v1078 = vunpack.c.l.b16 %v343
        %v1079 = vunpack.c.h.b16 %v343
        %v1080 = vunpack.c.l.b16 %v344
        %v1081 = vunpack.c.h.b16 %v344
        %v1082 = vunpack.c.l.b16 %v345
        %v1083 = vunpack.c.h.b16 %v345
        %v1084 = vunpack.c.l.b16 %v346
        %v1085 = vunpack.c.h.b16 %v346
        %v1086 = vunpack.c.l.b16 %v347
        %v1087 = vunpack.c.h.b16 %v347
        %v1088 = vunpack.c.l.b16 %v348
        %v1089 = vunpack.c.h.b16 %v348
        %v1090 = vunpack.c.l.b16 %v349
        %v1091 = vunpack.c.h.b16 %v349
        %v1092 = vunpack.c.l.b16 %v350
        %v1093 = vunpack.c.h.b16 %v350
        %v1094 = vunpack.c.l.b16 %v351
        %v1095 = vunpack.c.h.b16 %v351
        %v1096 = vunpack.c.l.b16 %v352
        %v1097 = vunpack.c.h.b16 %v352
        %v1098 = vunpack.c.l.b16 %v353
        %v1099 = vunpack.c.h.b16 %v353
        %v1100 = vunpack.c.l.b16 %v354
        %v1101 = vunpack.c.h.b16 %v354
        %v1102 = vunpack.c.l.b16 %v355
        %v1103 = vunpack.c.h.b16 %v355
        %v1104 = vunpack.c.l.b16 %v356
        %v1105 = vunpack.c.h.b16 %v356
        %v1106 = vunpack.c.l.b16 %v357
        %v1107 = vunpack.c.h.b16 %v357
        %v1108 = vunpack.c.l.b16 %v358
        %v1109 = vunpack.c.h.b16 %v358
        %v1110 = vunpack.c.l.b16 %v359
        %v1111 = vunpack.c.h.b16 %v359
        %v1112 = vunpack.c.l.b16 %v360
        %v1113 = vunpack.c.h.b16 %v360
        %v1114 = vunpack.c.l.b16 %v361
        %v1115 = vunpack.c.h.b16 %v361
        %v1116 = vunpack.c.l.b16 %v362
        %v1117 = vunpack.c.h.b16 %v362
        %v1118 = vunpack.c.l.b16 %v363
        %v1119 = vunpack.c.h.b16 %v363
        %v1120 = vunpack.c.l.b16 %v364
        %v1121 = vunpack.c.h.b16 %v364
        %v1122 = vunpack.c.l.b16 %v365
        %v1123 = vunpack.c.h.b16 %v365
        %v1124 = vunpack.c.l.b16 %v366
        %v1125 = vunpack.c.h.b16 %v366
        %v1126 = vunpack.c.l.b16 %v367
        %v1127 = vunpack.c.h.b16 %v367
        %v1128 = vunpack.c.l.b16 %v368
        %v1129 = vunpack.c.h.b16 %v368
        %v1130 = vunpack.c.l.b16 %v369
        %v1131 = vunpack.c.h.b16 %v369
        %v1132 = vunpack.c.l.b16 %v370
        %v1133 = vunpack.c.h.b16 %v370
        %v1134 = vunpack.c.l.b16 %v371
        %v1135 = vunpack.c.h.b16 %v371
        %v1136 = vunpack.c.l.b16 %v372
        %v1137 = vunpack.c.h.b16 %v372
        %v1138 = vunpack.c.l.b16 %v373
        %v1139 = vunpack.c.h.b16 %v373
        %v1140 = vunpack.c.l.b16 %v374
        %v1141 = vunpack.c.h.b16 %v374
        %v1142 = vunpack.c.l.b16 %v375
        %v1143 = vunpack.c.h.b16 %v375
        %v1144 = vunpack.c.l.b16 %v376
        %v1145 = vunpack.c.h.b16 %v376
        %v1146 = vunpack.c.l.b16 %v377
        %v1147 = vunpack.c.h.b16 %v377
        %v1148 = vunpack.c.l.b16 %v378
        %v1149 = vunpack.c.h.b16 %v378
        %v1150 = vunpack.c.l.b16 %v379
        %v1151 = vunpack.c.h.b16 %v379
        %v1152 = vunpack.c.l.b16 %v380
        %v1153 = vunpack.c.h.b16 %v380
        %v1154 = vunpack.c.l.b16 %v381
        %v1155 = vunpack.c.h.b16 %v381
        %v1156 = vunpack.c.l.b16 %v382
        %v1157 = vunpack.c.h.b16 %v382
        %v1158 = vunpack.c.l.b16 %v383
        %v1159 = vunpack.c.h.b16 %v383
        %v1160 = vunpack.c.l.b16 %v384
        %v1161 = vunpack.c.h.b16 %v384
        %v1162 = vunpack.c.l.b16 %v385
        %v1163 = vunpack.c.h.b16 %v385
        %v1164 = vunpack.c.l.b16 %v386
        %v1165 = vunpack.c.h.b16 %v386
        %v1166 = vunpack.c.l.b16 %v387
        %v1167 = vunpack.c.h.b16 %v387
        %v1168 = vunpack.c.l.b16 %v388
        %v1169 = vunpack.c.h.b16 %v388
        %v1170 = vunpack.c.l.b16 %v389
        %v1171 = vunpack.c.h.b16 %v389
        %v1172 = vunpack.c.l.b16 %v390
        %v1173 = vunpack.c.h.b16 %v390
        %v1174 = vunpack.c.l.b16 %v391
        %v1175 = vunpack.c.h.b16 %v391
        %v1176 = vunpack.c.l.b16 %v392
        %v1177 = vunpack.c.h.b16 %v392
        %v1178 = vunpack.c.l.b16 %v393
        %v1179 = vunpack.c.h.b16 %v393
        %v1180 = vunpack.c.l.b16 %v394
        %v1181 = vunpack.c.h.b16 %v394
        %v1182 = vunpack.c.l.b16 %v395
        %v1183 = vunpack.c.h.b16 %v395
        %v1184 = vunpack.c.l.b16 %v396
        %v1185 = vunpack.c.h.b16 %v396
        %v1186 = vunpack.c.l.b16 %v397
        %v1187 = vunpack.c.h.b16 %v397
        %v1188 = vunpack.c.l.b16 %v398
        %v1189 = vunpack.c.h.b16 %v398
        %v1190 = vunpack.c.l.b16 %v399
        %v1191 = vunpack.c.h.b16 %v399
        %v1192 = vunpack.c.l.b16 %v400
        %v1193 = vunpack.c.h.b16 %v400
        %v1194 = vunpack.c.l.b16 %v401
        %v1195 = vunpack.c.h.b16 %v401
        %v1196 = vunpack.c.l.b16 %v402
        %v1197 = vunpack.c.h.b16 %v402
        %v1198 = vunpack.c.l.b16 %v403
        %v1199 = vunpack.c.h.b16 %v403
        %v1200 = vunpack.c.l.b16 %v404
        %v1201 = vunpack.c.h.b16 %v404
        %v1202 = vunpack.c.l.b16 %v405
        %v1203 = vunpack.c.h.b16 %v405
        %v1204 = vunpack.c.l.b16 %v406
        %v1205 = vunpack.c.h.b16 %v406
        %v1206 = vunpack.c.l.b16 %v407
        %v1207 = vunpack.c.h.b16 %v407
        %v1208 = vunpack.c.l.b16 %v408
        %v1209 = vunpack.c.h.b16 %v408
        %v1210 = vunpack.c.l.b16 %v409
        %v1211 = vunpack.c.h.b16 %v409
        %v1212 = vunpack.c.l.b16 %v410
        %v1213 = vunpack.c.h.b16 %v410
        %v1214 = vunpack.c.l.b16 %v411
        %v1215 = vunpack.c.h.b16 %v411
        %v1216 = vunpack.c.l.b16 %v412
        %v1217 = vunpack.c.h.b16 %v412
        %v1218 = vunpack.c.l.b16 %v413
        %v1219 = vunpack.c.h.b16 %v413
        %v1220 = vunpack.c.l.b16 %v414
        %v1221 = vunpack.c.h.b16 %v414
        %v1222 = vunpack.c.l.b16 %v415
        %v1223 = vunpack.c.h.b16 %v415
        %v1224 = vunpack.c.l.b16 %v416
        %v1225 = vunpack.c.h.b16 %v416
        %v1226 = vunpack.c.l.b16 %v417
        %v1227 = vunpack.c.h.b16 %v417
        %v1228 = vunpack.c.l.b16 %v418
        %v1229 = vunpack.c.h.b16 %v418
        %v1230 = vunpack.c.l.b16 %v419
        %v1231 = vunpack.c.h.b16 %v419
        %v1232 = vunpack.c.l.b16 %v420
        %v1233 = vunpack.c.h.b16 %v420
        %v1234 = vunpack.c.l.b16 %v421
        %v1235 = vunpack.c.h.b16 %v421
        %v1236 = vunpack.c.l.b16 %v422
        %v1237 = vunpack.c.h.b16 %v422
        %v1238 = vunpack.c.l.b16 %v423
        %v1239 = vunpack.c.h.b16 %v423
        %v1240 = vunpack.c.l.b16 %v424
        %v1241 = vunpack.c.h.b16 %v424
        %v1242 = vunpack.c.l.b16 %v425
        %v1243 = vunpack.c.h.b16 %v425
        %v1244 = vunpack.c.l.b16 %v426
        %v1245 = vunpack.c.h.b16 %v426
        %v1246 = vunpack.c.l.b16 %v427
        %v1247 = vunpack.c.h.b16 %v427
        %v1248 = vunpack.c.l.b16 %v428
        %v1249 = vunpack.c.h.b16 %v428
        %v1250 = vunpack.c.l.b16 %v429
        %v1251 = vunpack.c.h.b16 %v429
        %v1252 = vunpack.c.l.b16 %v430
        %v1253 = vunpack.c.h.b16 %v430
        %v1254 = vunpack.c.l.b16 %v431
        %v1255 = vunpack.c.h.b16 %v431
        %v1256 = vunpack.c.l.b16 %v432
        %v1257 = vunpack.c.h.b16 %v432
        %v1258 = vunpack.c.l.b16 %v433
        %v1259 = vunpack.c.h.b16 %v433
        %v1260 = vunpack.c.l.b16 %v434
        %v1261 = vunpack.c.h.b16 %v434
        %v1262 = vunpack.c.l.b16 %v435
        %v1263 = vunpack.c.h.b16 %v435
        %v1264 = vunpack.c.l.b16 %v436
        %v1265 = vunpack.c.h.b16 %v436
        %v1266 = vunpack.c.l.b16 %v437
        %v1267 = vunpack.c.h.b16 %v437
        %v1268 = vunpack.c.l.b16 %v438
        %v1269 = vunpack.c.h.b16 %v438
        %v1270 = vunpack.c.l.b16 %v439
        %v1271 = vunpack.c.h.b16 %v439
        %v1272 = vunpack.c.l.b16 %v440
        %v1273 = vunpack.c.h.b16 %v440
        %v1274 = vunpack.c.l.b16 %v441
        %v1275 = vunpack.c.h.b16 %v441
        %v1276 = vunpack.c.l.b16 %v442
        %v1277 = vunpack.c.h.b16 %v442
        %v1278 = vunpack.c.l.b16 %v443
        %v1279 = vunpack.c.h.b16 %v443
        %v1280 = vunpack.c.l.b16 %v444
        %v1281 = vunpack.c.h.b16 %v444
        %v1282 = vunpack.c.l.b16 %v445
        %v1283 = vunpack.c.h.b16 %v445
        %v1284 = vunpack.c.l.b16 %v446
        %v1285 = vunpack.c.h.b16 %v446
        %v1286 = vunpack.c.l.b16 %v447
        %v1287 = vunpack.c.h.b16 %v447
        %v1288 = vunpack.c.l.b16 %v448
        %v1289 = vunpack.c.h.b16 %v448
        %v1290 = vunpack.c.l.b16 %v449
        %v1291 = vunpack.c.h.b16 %v449
        %v1292 = vunpack.c.l.b16 %v450
        %v1293 = vunpack.c.h.b16 %v450
        %v1294 = vunpack.c.l.b16 %v451
        %v1295 = vunpack.c.h.b16 %v451
        %v1296 = vunpack.c.l.b16 %v452
        %v1297 = vunpack.c.h.b16 %v452
        %v1298 = vunpack.c.l.b16 %v453
        %v1299 = vunpack.c.h.b16 %v453
        %v1300 = vunpack.c.l.b16 %v454
        %v1301 = vunpack.c.h.b16 %v454
        %v1302 = vunpack.c.l.b16 %v455
        %v1303 = vunpack.c.h.b16 %v455
        %v1304 = vunpack.c.l.b16 %v456
        %v1305 = vunpack.c.h.b16 %v456
        %v1306 = vunpack.c.l.b16 %v457
        %v1307 = vunpack.c.h.b16 %v457
        %v1308 = vunpack.c.l.b16 %v458
        %v1309 = vunpack.c.h.b16 %v458
        %v1310 = vunpack.c.l.b16 %v459
        %v1311 = vunpack.c.h.b16 %v459
        %v1312 = vunpack.c.l.b16 %v460
        %v1313 = vunpack.c.h.b16 %v460
        %v1314 = vunpack.c.l.b16 %v461
        %v1315 = vunpack.c.h.b16 %v461
        %v1316 = vunpack.c.l.b16 %v462
        %v1317 = vunpack.c.h.b16 %v462
        %v1318 = vunpack.c.l.b16 %v463
        %v1319 = vunpack.c.h.b16 %v463
        %v1320 = vunpack.c.l.b16 %v464
        %v1321 = vunpack.c.h.b16 %v464
        %v1322 = vunpack.c.l.b16 %v465
        %v1323 = vunpack.c.h.b16 %v465
        %v1324 = vunpack.c.l.b16 %v466
        %v1325 = vunpack.c.h.b16 %v466
        %v1326 = vunpack.c.l.b16 %v467
        %v1327 = vunpack.c.h.b16 %v467
        %v1328 = vunpack.c.l.b16 %v468
        %v1329 = vunpack.c.h.b16 %v468
        %v1330 = vunpack.c.l.b16 %v469
        %v1331 = vunpack.c.h.b16 %v469
        %v1332 = vunpack.c.l.b16 %v470
        %v1333 = vunpack.c.h.b16 %v470
        %v1334 = vunpack.c.l.b16 %v471
        %v1335 = vunpack.c.h.b16 %v471
        %v1336 = vpack.c.b16 %v766, %v760
        %v1337 = vpack.c.b16 %v767, %v761
        %v1338 = vpack.c.b16 %v768, %v762
        %v1339 = vpack.c.b16 %v769, %v763
        %v1340 = vpack.c.b16 %v770, %v764
        %v1341 = vpack.c.b16 %v771, %v765
        %v1342 = vpack.c.b16 %v778, %v772
        %v1343 = vpack.c.b16 %v779, %v773
        %v1344 = vpack.c.b16 %v780, %v774
        %v1345 = vpack.c.b16 %v781, %v775
        %v1346 = vpack.c.b16 %v782, %v776
        %v1347 = vpack.c.b16 %v783, %v777
        %v1348 = vpack.c.b16 %v790, %v784
        %v1349 = vpack.c.b16 %v791, %v785
        %v1350 = vpack.c.b16 %v792, %v786
        %v1351 = vpack.c.b16 %v793, %v787
        %v1352 = vpack.c.b16 %v794, %v788
        %v1353 = vpack.c.b16 %v795, %v789
        %v1354 = vpack.c.b16 %v802, %v796
        %v1355 = vpack.c.b16 %v803, %v797
        %v1356 = vpack.c.b16 %v804, %v798
        %v1357 = vpack.c.b16 %v805, %v799
        %v1358 = vpack.c.b16 %v806, %v800
        %v1359 = vpack.c.b16 %v807, %v801
        %v1360 = vpack.c.b16 %v814, %v808
        %v1361 = vpack.c.b16 %v815, %v809
        %v1362 = vpack.c.b16 %v816, %v810
        %v1363 = vpack.c.b16 %v817, %v811
        %v1364 = vpack.c.b16 %v818, %v812
        %v1365 = vpack.c.b16 %v819, %v813
        %v1366 = vpack.c.b16 %v826, %v820
        %v1367 = vpack.c.b16 %v827, %v821
        %v1368 = vpack.c.b16 %v828, %v822
        %v1369 = vpack.c.b16 %v829, %v823
        %v1370 = vpack.c.b16 %v830, %v824
        %v1371 = vpack.c.b16 %v831, %v825
        %v1372 = vpack.c.b16 %v838, %v832
        %v1373 = vpack.c.b16 %v839, %v833
        %v1374 = vpack.c.b16 %v840, %v834
        %v1375 = vpack.c.b16 %v841, %v835
        %v1376 = vpack.c.b16 %v842, %v836
        %v1377 = vpack.c.b16 %v843, %v837
        %v1378 = vpack.c.b16 %v850, %v844
        %v1379 = vpack.c.b16 %v851, %v845
        %v1380 = vpack.c.b16 %v852, %v846
        %v1381 = vpack.c.b16 %v853, %v847
        %v1382 = vpack.c.b16 %v854, %v848
        %v1383 = vpack.c.b16 %v855, %v849
        %v1384 = vpack.c.b16 %v862, %v856
        %v1385 = vpack.c.b16 %v863, %v857
        %v1386 = vpack.c.b16 %v864, %v858
        %v1387 = vpack.c.b16 %v865, %v859
        %v1388 = vpack.c.b16 %v866, %v860
        %v1389 = vpack.c.b16 %v867, %v861
        %v1390 = vpack.c.b16 %v874, %v868
        %v1391 = vpack.c.b16 %v875, %v869
        %v1392 = vpack.c.b16 %v876, %v870
        %v1393 = vpack.c.b16 %v877, %v871
        %v1394 = vpack.c.b16 %v878, %v872
        %v1395 = vpack.c.b16 %v879, %v873
        %v1396 = vpack.c.b16 %v886, %v880
        %v1397 = vpack.c.b16 %v887, %v881
        %v1398 = vpack.c.b16 %v888, %v882
        %v1399 = vpack.c.b16 %v889, %v883
        %v1400 = vpack.c.b16 %v890, %v884
        %v1401 = vpack.c.b16 %v891, %v885
        %v1402 = vpack.c.b16 %v898, %v892
        %v1403 = vpack.c.b16 %v899, %v893
        %v1404 = vpack.c.b16 %v900, %v894
        %v1405 = vpack.c.b16 %v901, %v895
        %v1406 = vpack.c.b16 %v902, %v896
        %v1407 = vpack.c.b16 %v903, %v897
        %v1408 = vpack.c.b16 %v910, %v904
        %v1409 = vpack.c.b16 %v911, %v905
        %v1410 = vpack.c.b16 %v912, %v906
        %v1411 = vpack.c.b16 %v913, %v907
        %v1412 = vpack.c.b16 %v914, %v908
        %v1413 = vpack.c.b16 %v915, %v909
        %v1414 = vpack.c.b16 %v922, %v916
        %v1415 = vpack.c.b16 %v923, %v917
        %v1416 = vpack.c.b16 %v924, %v918
        %v1417 = vpack.c.b16 %v925, %v919
        %v1418 = vpack.c.b16 %v926, %v920
        %v1419 = vpack.c.b16 %v927, %v921
        %v1420 = vpack.c.b16 %v934, %v928
        %v1421 = vpack.c.b16 %v935, %v929
        %v1422 = vpack.c.b16 %v936, %v930
        %v1423 = vpack.c.b16 %v937, %v931
        %v1424 = vpack.c.b16 %v938, %v932
        %v1425 = vpack.c.b16 %v939, %v933
        %v1426 = vpack.c.b16 %v946, %v940
        %v1427 = vpack.c.b16 %v947, %v941
        %v1428 = vpack.c.b16 %v948, %v942
        %v1429 = vpack.c.b16 %v949, %v943
        %v1430 = vpack.c.b16 %v950, %v944
        %v1431 = vpack.c.b16 %v951, %v945
        %v1432 = vpack.c.b16 %v958, %v952
        %v1433 = vpack.c.b16 %v959, %v953
        %v1434 = vpack.c.b16 %v960, %v954
        %v1435 = vpack.c.b16 %v961, %v955
        %v1436 = vpack.c.b16 %v962, %v956
        %v1437 = vpack.c.b16 %v963, %v957
        %v1438 = vpack.c.b16 %v970, %v964
        %v1439 = vpack.c.b16 %v971, %v965
        %v1440 = vpack.c.b16 %v972, %v966
        %v1441 = vpack.c.b16 %v973, %v967
        %v1442 = vpack.c.b16 %v974, %v968
        %v1443 = vpack.c.b16 %v975, %v969
        %v1444 = vpack.c.b16 %v982, %v976
        %v1445 = vpack.c.b16 %v983, %v977
        %v1446 = vpack.c.b16 %v984, %v978
        %v1447 = vpack.c.b16 %v985, %v979
        %v1448 = vpack.c.b16 %v986, %v980
        %v1449 = vpack.c.b16 %v987, %v981
        %v1450 = vpack.c.b16 %v994, %v988
        %v1451 = vpack.c.b16 %v995, %v989
        %v1452 = vpack.c.b16 %v996, %v990
        %v1453 = vpack.c.b16 %v997, %v991
        %v1454 = vpack.c.b16 %v998, %v992
        %v1455 = vpack.c.b16 %v999, %v993
        %v1456 = vpack.c.b16 %v1006, %v1000
        %v1457 = vpack.c.b16 %v1007, %v1001
        %v1458 = vpack.c.b16 %v1008, %v1002
        %v1459 = vpack.c.b16 %v1009, %v1003
        %v1460 = vpack.c.b16 %v1010, %v1004
        %v1461 = vpack.c.b16 %v1011, %v1005
        %v1462 = vpack.c.b16 %v1018, %v1012
        %v1463 = vpack.c.b16 %v1019, %v1013
        %v1464 = vpack.c.b16 %v1020, %v1014
        %v1465 = vpack.c.b16 %v1021, %v1015
        %v1466 = vpack.c.b16 %v1022, %v1016
        %v1467 = vpack.c.b16 %v1023, %v1017
        %v1468 = vpack.c.b16 %v1030, %v1024
        %v1469 = vpack.c.b16 %v1031, %v1025
        %v1470 = vpack.c.b16 %v1032, %v1026
        %v1471 = vpack.c.b16 %v1033, %v1027
        %v1472 = vpack.c.b16 %v1034, %v1028
        %v1473 = vpack.c.b16 %v1035, %v1029
        %v1474 = vpack.c.b16 %v1042, %v1036
        %v1475 = vpack.c.b16 %v1043, %v1037
        %v1476 = vpack.c.b16 %v1044, %v1038
        %v1477 = vpack.c.b16 %v1045, %v1039
        %v1478 = vpack.c.b16 %v1046, %v1040
        %v1479 = vpack.c.b16 %v1047, %v1041
        %v1480 = vpack.c.b16 %v1054, %v1048
        %v1481 = vpack.c.b16 %v1055, %v1049
        %v1482 = vpack.c.b16 %v1056, %v1050
        %v1483 = vpack.c.b16 %v1057, %v1051
        %v1484 = vpack.c.b16 %v1058, %v1052
        %v1485 = vpack.c.b16 %v1059, %v1053
        %v1486 = vpack.c.b16 %v1066, %v1060
        %v1487 = vpack.c.b16 %v1067, %v1061
        %v1488 = vpack.c.b16 %v1068, %v1062
        %v1489 = vpack.c.b16 %v1069, %v1063
        %v1490 = vpack.c.b16 %v1070, %v1064
        %v1491 = vpack.c.b16 %v1071, %v1065
        %v1492 = vpack.c.b16 %v1078, %v1072
        %v1493 = vpack.c.b16 %v1079, %v1073
        %v1494 = vpack.c.b16 %v1080, %v1074
        %v1495 = vpack.c.b16 %v1081, %v1075
        %v1496 = vpack.c.b16 %v1082, %v1076
        %v1497 = vpack.c.b16 %v1083, %v1077
        %v1498 = vpack.c.b16 %v1090, %v1084
        %v1499 = vpack.c.b16 %v1091, %v1085
        %v1500 = vpack.c.b16 %v1092, %v1086
        %v1501 = vpack.c.b16 %v1093, %v1087
        %v1502 = vpack.c.b16 %v1094, %v1088
        %v1503 = vpack.c.b16 %v1095, %v1089
        %v1504 = vpack.c.b16 %v1102, %v1096
        %v1505 = vpack.c.b16 %v1103, %v1097
        %v1506 = vpack.c.b16 %v1104, %v1098
        %v1507 = vpack.c.b16 %v1105, %v1099
        %v1508 = vpack.c.b16 %v1106, %v1100
        %v1509 = vpack.c.b16 %v1107, %v1101
        %v1510 = vpack.c.b16 %v1114, %v1108
        %v1511 = vpack.c.b16 %v1115, %v1109
        %v1512 = vpack.c.b16 %v1116, %v1110
        %v1513 = vpack.c.b16 %v1117, %v1111
        %v1514 = vpack.c.b16 %v1118, %v1112
        %v1515 = vpack.c.b16 %v1119, %v1113
        %v1516 = vpack.c.b16 %v1126, %v1120
        %v1517 = vpack.c.b16 %v1127, %v1121
        %v1518 = vpack.c.b16 %v1128, %v1122
        %v1519 = vpack.c.b16 %v1129, %v1123
        %v1520 = vpack.c.b16 %v1130, %v1124
        %v1521 = vpack.c.b16 %v1131, %v1125
        %v1522 = vpack.c.b16 %v1138, %v1132
        %v1523 = vpack.c.b16 %v1139, %v1133
        %v1524 = vpack.c.b16 %v1140, %v1134
        %v1525 = vpack.c.b16 %v1141, %v1135
        %v1526 = vpack.c.b16 %v1142, %v1136
        %v1527 = vpack.c.b16 %v1143, %v1137
        %v1528 = vpack.c.b16 %v1150, %v1144
        %v1529 = vpack.c.b16 %v1151, %v1145
        %v1530 = vpack.c.b16 %v1152, %v1146
        %v1531 = vpack.c.b16 %v1153, %v1147
        %v1532 = vpack.c.b16 %v1154, %v1148
        %v1533 = vpack.c.b16 %v1155, %v1149
        %v1534 = vpack.c.b16 %v1162, %v1156
        %v1535 = vpack.c.b16 %v1163, %v1157
        %v1536 = vpack.c.b16 %v1164, %v1158
        %v1537 = vpack.c.b16 %v1165, %v1159
        %v1538 = vpack.c.b16 %v1166, %v1160
        %v1539 = vpack.c.b16 %v1167, %v1161
        %v1540 = vpack.c.b16 %v1174, %v1168
        %v1541 = vpack.c.b16 %v1175, %v1169
        %v1542 = vpack.c.b16 %v1176, %v1170
        %v1543 = vpack.c.b16 %v1177, %v1171
        %v1544 = vpack.c.b16 %v1178, %v1172
        %v1545 = vpack.c.b16 %v1179, %v1173
        %v1546 = vpack.c.b16 %v1186, %v1180
        %v1547 = vpack.c.b16 %v1187, %v1181
        %v1548 = vpack.c.b16 %v1188, %v1182
        %v1549 = vpack.c.b16 %v1189, %v1183
        %v1550 = vpack.c.b16 %v1190, %v1184
        %v1551 = vpack.c.b16 %v1191, %v1185
        %v1552 = vpack.c.b16 %v1198, %v1192
        %v1553 = vpack.c.b16 %v1199, %v1193
        %v1554 = vpack.c.b16 %v1200, %v1194
        %v1555 = vpack.c.b16 %v1201, %v1195
        %v1556 = vpack.c.b16 %v1202, %v1196
        %v1557 = vpack.c.b16 %v1203, %v1197
        %v1558 = vpack.c.b16 %v1210, %v1204
        %v1559 = vpack.c.b16 %v1211, %v1205
        %v1560 = vpack.c.b16 %v1212, %v1206
        %v1561 = vpack.c.b16 %v1213, %v1207
        %v1562 = vpack.c.b16 %v1214, %v1208
        %v1563 = vpack.c.b16 %v1215, %v1209
        %v1564 = vpack.c.b16 %v1222, %v1216
        %v1565 = vpack.c.b16 %v1223, %v1217
        %v1566 = vpack.c.b16 %v1224, %v1218
        %v1567 = vpack.c.b16 %v1225, %v1219
        %v1568 = vpack.c.b16 %v1226, %v1220
        %v1569 = vpack.c.b16 %v1227, %v1221
        %v1570 = vpack.c.b16 %v1234, %v1228
        %v1571 = vpack.c.b16 %v1235, %v1229
        %v1572 = vpack.c.b16 %v1236, %v1230
        %v1573 = vpack.c.b16 %v1237, %v1231
        %v1574 = vpack.c.b16 %v1238, %v1232
        %v1575 = vpack.c.b16 %v1239, %v1233
        %v1576 = vpack.c.b16 %v1246, %v1240
        %v1577 = vpack.c.b16 %v1247, %v1241
        %v1578 = vpack.c.b16 %v1248, %v1242
        %v1579 = vpack.c.b16 %v1249, %v1243
        %v1580 = vpack.c.b16 %v1250, %v1244
        %v1581 = vpack.c.b16 %v1251, %v1245
        %v1582 = vpack.c.b16 %v1258, %v1252
        %v1583 = vpack.c.b16 %v1259, %v1253
        %v1584 = vpack.c.b16 %v1260, %v1254
        %v1585 = vpack.c.b16 %v1261, %v1255
        %v1586 = vpack.c.b16 %v1262, %v1256
        %v1587 = vpack.c.b16 %v1263, %v1257
        %v1588 = vpack.c.b16 %v1270, %v1264
        %v1589 = vpack.c.b16 %v1271, %v1265
        %v1590 = vpack.c.b16 %v1272, %v1266
        %v1591 = vpack.c.b16 %v1273, %v1267
        %v1592 = vpack.c.b16 %v1274, %v1268
        %v1593 = vpack.c.b16 %v1275, %v1269
        %v1594 = vpack.c.b16 %v1282, %v1276
        %v1595 = vpack.c.b16 %v1283, %v1277
        %v1596 = vpack.c.b16 %v1284, %v1278
        %v1597 = vpack.c.b16 %v1285, %v1279
        %v1598 = vpack.c.b16 %v1286, %v1280
        %v1599 = vpack.c.b16 %v1287, %v1281
        %v1600 = vpack.c.b16 %v1294, %v1288
        %v1601 = vpack.c.b16 %v1295, %v1289
        %v1602 = vpack.c.b16 %v1296, %v1290
        %v1603 = vpack.c.b16 %v1297, %v1291
        %v1604 = vpack.c.b16 %v1298, %v1292
        %v1605 = vpack.c.b16 %v1299, %v1293
        %v1606 = vpack.c.b16 %v1306, %v1300
        %v1607 = vpack.c.b16 %v1307, %v1301
        %v1608 = vpack.c.b16 %v1308, %v1302
        %v1609 = vpack.c.b16 %v1309, %v1303
        %v1610 = vpack.c.b16 %v1310, %v1304
        %v1611 = vpack.c.b16 %v1311, %v1305
        %v1612 = vpack.c.b16 %v1318, %v1312
        %v1613 = vpack.c.b16 %v1319, %v1313
        %v1614 = vpack.c.b16 %v1320, %v1314
        %v1615 = vpack.c.b16 %v1321, %v1315
        %v1616 = vpack.c.b16 %v1322, %v1316
        %v1617 = vpack.c.b16 %v1323, %v1317
        %v1618 = vpack.c.b16 %v1330, %v1324
        %v1619 = vpack.c.b16 %v1331, %v1325
        %v1620 = vpack.c.b16 %v1332, %v1326
        %v1621 = vpack.c.b16 %v1333, %v1327
        %v1622 = vpack.c.b16 %v1334, %v1328
        %v1623 = vpack.c.b16 %v1335, %v1329
        %1912 = vmatpush.bf16.msra.mxu0 %v1378
        %1913 = vmatpush.bf16.msra.mxu0 %v1372
        %1914 = vmatpush.bf16.msra.mxu0 %v1366
        %1915 = vmatpush.bf16.msra.mxu0 %v1360
        %1916 = vmatpush.bf16.msra.mxu0 %v1354
        %1917 = vmatpush.bf16.msra.mxu0 %v1348
        %1918 = vmatpush.bf16.msra.mxu0 %v1342
        %1919 = vmatpush.bf16.msra.mxu0 %v1336
        %1920 = vmatmul.bf16.gmra.mxu0 %v178
        %v1921 = vpop.f32.mrf.mxu0
        %v1922 = vadd.f32 0.0, %v1921
        %v1923 = vpop.f32.mrf.mxu0
        %1924 = vdwg.mxu0
        %1925 = vmatpush.bf16.msra.mxu0 %v1426
        %1926 = vmatpush.bf16.msra.mxu0 %v1420
        %1927 = vmatpush.bf16.msra.mxu0 %v1414
        %1928 = vmatpush.bf16.msra.mxu0 %v1408
        %1929 = vmatpush.bf16.msra.mxu0 %v1402
        %1930 = vmatpush.bf16.msra.mxu0 %v1396
        %1931 = vmatpush.bf16.msra.mxu0 %v1390
        %1932 = vmatpush.bf16.msra.mxu0 %v1384
        %1933 = vmatmul.bf16.gmra.mxu0 %v179
        %v1934 = vpop.f32.mrf.mxu0
        %v1935 = vadd.f32 %v1922, %v1934
        %v1936 = vpop.f32.mrf.mxu0
        %1937 = vdwg.mxu0
        %1938 = vmatpush.bf16.msra.mxu0 %v1474
        %1939 = vmatpush.bf16.msra.mxu0 %v1468
        %1940 = vmatpush.bf16.msra.mxu0 %v1462
        %1941 = vmatpush.bf16.msra.mxu0 %v1456
        %1942 = vmatpush.bf16.msra.mxu0 %v1450
        %1943 = vmatpush.bf16.msra.mxu0 %v1444
        %1944 = vmatpush.bf16.msra.mxu0 %v1438
        %1945 = vmatpush.bf16.msra.mxu0 %v1432
        %1946 = vmatmul.bf16.gmra.mxu0 %v180
        %v1947 = vpop.f32.mrf.mxu0
        %v1948 = vadd.f32 %v1935, %v1947
        %v1949 = vpop.f32.mrf.mxu0
        %1950 = vdwg.mxu0
        %1951 = vmatpush.bf16.msra.mxu0 %v1522
        %1952 = vmatpush.bf16.msra.mxu0 %v1516
        %1953 = vmatpush.bf16.msra.mxu0 %v1510
        %1954 = vmatpush.bf16.msra.mxu0 %v1504
        %1955 = vmatpush.bf16.msra.mxu0 %v1498
        %1956 = vmatpush.bf16.msra.mxu0 %v1492
        %1957 = vmatpush.bf16.msra.mxu0 %v1486
        %1958 = vmatpush.bf16.msra.mxu0 %v1480
        %1959 = vmatmul.bf16.gmra.mxu0 %v181
        %v1960 = vpop.f32.mrf.mxu0
        %v1961 = vadd.f32 %v1948, %v1960
        %v1962 = vpop.f32.mrf.mxu0
        %1963 = vdwg.mxu0
        %1964 = vmatpush.bf16.msra.mxu0 %v1570
        %1965 = vmatpush.bf16.msra.mxu0 %v1564
        %1966 = vmatpush.bf16.msra.mxu0 %v1558
        %1967 = vmatpush.bf16.msra.mxu0 %v1552
        %1968 = vmatpush.bf16.msra.mxu0 %v1546
        %1969 = vmatpush.bf16.msra.mxu0 %v1540
        %1970 = vmatpush.bf16.msra.mxu0 %v1534
        %1971 = vmatpush.bf16.msra.mxu0 %v1528
        %1972 = vmatmul.bf16.gmra.mxu0 %v182
        %v1973 = vpop.f32.mrf.mxu0
        %v1974 = vadd.f32 %v1961, %v1973
        %v1975 = vpop.f32.mrf.mxu0
        %1976 = vdwg.mxu0
        %1977 = vmatpush.bf16.msra.mxu0 %v1618
        %1978 = vmatpush.bf16.msra.mxu0 %v1612
        %1979 = vmatpush.bf16.msra.mxu0 %v1606
        %1980 = vmatpush.bf16.msra.mxu0 %v1600
        %1981 = vmatpush.bf16.msra.mxu0 %v1594
        %1982 = vmatpush.bf16.msra.mxu0 %v1588
        %1983 = vmatpush.bf16.msra.mxu0 %v1582
        %1984 = vmatpush.bf16.msra.mxu0 %v1576
        %1985 = vmatmul.bf16.gmra.mxu0 %v183
        %v1986 = vpop.f32.mrf.mxu0
        %v1987 = vadd.f32 %v1974, %v1986
        %v1988 = vpop.f32.mrf.mxu0
        %1989 = vdwg.mxu0
        %1990 = vmatpush.bf16.msra.mxu0 %v1379
        %1991 = vmatpush.bf16.msra.mxu0 %v1373
        %1992 = vmatpush.bf16.msra.mxu0 %v1367
        %1993 = vmatpush.bf16.msra.mxu0 %v1361
        %1994 = vmatpush.bf16.msra.mxu0 %v1355
        %1995 = vmatpush.bf16.msra.mxu0 %v1349
        %1996 = vmatpush.bf16.msra.mxu0 %v1343
        %1997 = vmatpush.bf16.msra.mxu0 %v1337
        %1998 = vmatmul.bf16.gmra.mxu0 %v178
        %v1999 = vpop.f32.mrf.mxu0
        %v2000 = vadd.f32 0.0, %v1999
        %v2001 = vpop.f32.mrf.mxu0
        %2002 = vdwg.mxu0
        %2003 = vmatpush.bf16.msra.mxu0 %v1427
        %2004 = vmatpush.bf16.msra.mxu0 %v1421
        %2005 = vmatpush.bf16.msra.mxu0 %v1415
        %2006 = vmatpush.bf16.msra.mxu0 %v1409
        %2007 = vmatpush.bf16.msra.mxu0 %v1403
        %2008 = vmatpush.bf16.msra.mxu0 %v1397
        %2009 = vmatpush.bf16.msra.mxu0 %v1391
        %2010 = vmatpush.bf16.msra.mxu0 %v1385
        %2011 = vmatmul.bf16.gmra.mxu0 %v179
        %v2012 = vpop.f32.mrf.mxu0
        %v2013 = vadd.f32 %v2000, %v2012
        %v2014 = vpop.f32.mrf.mxu0
        %2015 = vdwg.mxu0
        %2016 = vmatpush.bf16.msra.mxu0 %v1475
        %2017 = vmatpush.bf16.msra.mxu0 %v1469
        %2018 = vmatpush.bf16.msra.mxu0 %v1463
        %2019 = vmatpush.bf16.msra.mxu0 %v1457
        %2020 = vmatpush.bf16.msra.mxu0 %v1451
        %2021 = vmatpush.bf16.msra.mxu0 %v1445
        %2022 = vmatpush.bf16.msra.mxu0 %v1439
        %2023 = vmatpush.bf16.msra.mxu0 %v1433
        %2024 = vmatmul.bf16.gmra.mxu0 %v180
        %v2025 = vpop.f32.mrf.mxu0
        %v2026 = vadd.f32 %v2013, %v2025
        %v2027 = vpop.f32.mrf.mxu0
        %2028 = vdwg.mxu0
        %2029 = vmatpush.bf16.msra.mxu0 %v1523
        %2030 = vmatpush.bf16.msra.mxu0 %v1517
        %2031 = vmatpush.bf16.msra.mxu0 %v1511
        %2032 = vmatpush.bf16.msra.mxu0 %v1505
        %2033 = vmatpush.bf16.msra.mxu0 %v1499
        %2034 = vmatpush.bf16.msra.mxu0 %v1493
        %2035 = vmatpush.bf16.msra.mxu0 %v1487
        %2036 = vmatpush.bf16.msra.mxu0 %v1481
        %2037 = vmatmul.bf16.gmra.mxu0 %v181
        %v2038 = vpop.f32.mrf.mxu0
        %v2039 = vadd.f32 %v2026, %v2038
        %v2040 = vpop.f32.mrf.mxu0
        %2041 = vdwg.mxu0
        %2042 = vmatpush.bf16.msra.mxu0 %v1571
        %2043 = vmatpush.bf16.msra.mxu0 %v1565
        %2044 = vmatpush.bf16.msra.mxu0 %v1559
        %2045 = vmatpush.bf16.msra.mxu0 %v1553
        %2046 = vmatpush.bf16.msra.mxu0 %v1547
        %2047 = vmatpush.bf16.msra.mxu0 %v1541
        %2048 = vmatpush.bf16.msra.mxu0 %v1535
        %2049 = vmatpush.bf16.msra.mxu0 %v1529
        %2050 = vmatmul.bf16.gmra.mxu0 %v182
        %v2051 = vpop.f32.mrf.mxu0
        %v2052 = vadd.f32 %v2039, %v2051
        %v2053 = vpop.f32.mrf.mxu0
        %2054 = vdwg.mxu0
        %2055 = vmatpush.bf16.msra.mxu0 %v1619
        %2056 = vmatpush.bf16.msra.mxu0 %v1613
        %2057 = vmatpush.bf16.msra.mxu0 %v1607
        %2058 = vmatpush.bf16.msra.mxu0 %v1601
        %2059 = vmatpush.bf16.msra.mxu0 %v1595
        %2060 = vmatpush.bf16.msra.mxu0 %v1589
        %2061 = vmatpush.bf16.msra.mxu0 %v1583
        %2062 = vmatpush.bf16.msra.mxu0 %v1577
        %2063 = vmatmul.bf16.gmra.mxu0 %v183
        %v2064 = vpop.f32.mrf.mxu0
        %v2065 = vadd.f32 %v2052, %v2064
        %v2066 = vpop.f32.mrf.mxu0
        %2067 = vdwg.mxu0
        %2068 = vmatpush.bf16.msra.mxu0 %v1380
        %2069 = vmatpush.bf16.msra.mxu0 %v1374
        %2070 = vmatpush.bf16.msra.mxu0 %v1368
        %2071 = vmatpush.bf16.msra.mxu0 %v1362
        %2072 = vmatpush.bf16.msra.mxu0 %v1356
        %2073 = vmatpush.bf16.msra.mxu0 %v1350
        %2074 = vmatpush.bf16.msra.mxu0 %v1344
        %2075 = vmatpush.bf16.msra.mxu0 %v1338
        %2076 = vmatmul.bf16.gmra.mxu0 %v178
        %v2077 = vpop.f32.mrf.mxu0
        %v2078 = vadd.f32 0.0, %v2077
        %v2079 = vpop.f32.mrf.mxu0
        %2080 = vdwg.mxu0
        %2081 = vmatpush.bf16.msra.mxu0 %v1428
        %2082 = vmatpush.bf16.msra.mxu0 %v1422
        %2083 = vmatpush.bf16.msra.mxu0 %v1416
        %2084 = vmatpush.bf16.msra.mxu0 %v1410
        %2085 = vmatpush.bf16.msra.mxu0 %v1404
        %2086 = vmatpush.bf16.msra.mxu0 %v1398
        %2087 = vmatpush.bf16.msra.mxu0 %v1392
        %2088 = vmatpush.bf16.msra.mxu0 %v1386
        %2089 = vmatmul.bf16.gmra.mxu0 %v179
        %v2090 = vpop.f32.mrf.mxu0
        %v2091 = vadd.f32 %v2078, %v2090
        %v2092 = vpop.f32.mrf.mxu0
        %2093 = vdwg.mxu0
        %2094 = vmatpush.bf16.msra.mxu0 %v1476
        %2095 = vmatpush.bf16.msra.mxu0 %v1470
        %2096 = vmatpush.bf16.msra.mxu0 %v1464
        %2097 = vmatpush.bf16.msra.mxu0 %v1458
        %2098 = vmatpush.bf16.msra.mxu0 %v1452
        %2099 = vmatpush.bf16.msra.mxu0 %v1446
        %2100 = vmatpush.bf16.msra.mxu0 %v1440
        %2101 = vmatpush.bf16.msra.mxu0 %v1434
        %2102 = vmatmul.bf16.gmra.mxu0 %v180
        %v2103 = vpop.f32.mrf.mxu0
        %v2104 = vadd.f32 %v2091, %v2103
        %v2105 = vpop.f32.mrf.mxu0
        %2106 = vdwg.mxu0
        %2107 = vmatpush.bf16.msra.mxu0 %v1524
        %2108 = vmatpush.bf16.msra.mxu0 %v1518
        %2109 = vmatpush.bf16.msra.mxu0 %v1512
        %2110 = vmatpush.bf16.msra.mxu0 %v1506
        %2111 = vmatpush.bf16.msra.mxu0 %v1500
        %2112 = vmatpush.bf16.msra.mxu0 %v1494
        %2113 = vmatpush.bf16.msra.mxu0 %v1488
        %2114 = vmatpush.bf16.msra.mxu0 %v1482
        %2115 = vmatmul.bf16.gmra.mxu0 %v181
        %v2116 = vpop.f32.mrf.mxu0
        %v2117 = vadd.f32 %v2104, %v2116
        %v2118 = vpop.f32.mrf.mxu0
        %2119 = vdwg.mxu0
        %2120 = vmatpush.bf16.msra.mxu0 %v1572
        %2121 = vmatpush.bf16.msra.mxu0 %v1566
        %2122 = vmatpush.bf16.msra.mxu0 %v1560
        %2123 = vmatpush.bf16.msra.mxu0 %v1554
        %2124 = vmatpush.bf16.msra.mxu0 %v1548
        %2125 = vmatpush.bf16.msra.mxu0 %v1542
        %2126 = vmatpush.bf16.msra.mxu0 %v1536
        %2127 = vmatpush.bf16.msra.mxu0 %v1530
        %2128 = vmatmul.bf16.gmra.mxu0 %v182
        %v2129 = vpop.f32.mrf.mxu0
        %v2130 = vadd.f32 %v2117, %v2129
        %v2131 = vpop.f32.mrf.mxu0
        %2132 = vdwg.mxu0
        %2133 = vmatpush.bf16.msra.mxu0 %v1620
        %2134 = vmatpush.bf16.msra.mxu0 %v1614
        %2135 = vmatpush.bf16.msra.mxu0 %v1608
        %2136 = vmatpush.bf16.msra.mxu0 %v1602
        %2137 = vmatpush.bf16.msra.mxu0 %v1596
        %2138 = vmatpush.bf16.msra.mxu0 %v1590
        %2139 = vmatpush.bf16.msra.mxu0 %v1584
        %2140 = vmatpush.bf16.msra.mxu0 %v1578
        %2141 = vmatmul.bf16.gmra.mxu0 %v183
        %v2142 = vpop.f32.mrf.mxu0
        %v2143 = vadd.f32 %v2130, %v2142
        %v2144 = vpop.f32.mrf.mxu0
        %2145 = vdwg.mxu0
        %2146 = vmatpush.bf16.msra.mxu0 %v1381
        %2147 = vmatpush.bf16.msra.mxu0 %v1375
        %2148 = vmatpush.bf16.msra.mxu0 %v1369
        %2149 = vmatpush.bf16.msra.mxu0 %v1363
        %2150 = vmatpush.bf16.msra.mxu0 %v1357
        %2151 = vmatpush.bf16.msra.mxu0 %v1351
        %2152 = vmatpush.bf16.msra.mxu0 %v1345
        %2153 = vmatpush.bf16.msra.mxu0 %v1339
        %2154 = vmatmul.bf16.gmra.mxu0 %v178
        %v2155 = vpop.f32.mrf.mxu0
        %v2156 = vadd.f32 0.0, %v2155
        %v2157 = vpop.f32.mrf.mxu0
        %2158 = vdwg.mxu0
        %2159 = vmatpush.bf16.msra.mxu0 %v1429
        %2160 = vmatpush.bf16.msra.mxu0 %v1423
        %2161 = vmatpush.bf16.msra.mxu0 %v1417
        %2162 = vmatpush.bf16.msra.mxu0 %v1411
        %2163 = vmatpush.bf16.msra.mxu0 %v1405
        %2164 = vmatpush.bf16.msra.mxu0 %v1399
        %2165 = vmatpush.bf16.msra.mxu0 %v1393
        %2166 = vmatpush.bf16.msra.mxu0 %v1387
        %2167 = vmatmul.bf16.gmra.mxu0 %v179
        %v2168 = vpop.f32.mrf.mxu0
        %v2169 = vadd.f32 %v2156, %v2168
        %v2170 = vpop.f32.mrf.mxu0
        %2171 = vdwg.mxu0
        %2172 = vmatpush.bf16.msra.mxu0 %v1477
        %2173 = vmatpush.bf16.msra.mxu0 %v1471
        %2174 = vmatpush.bf16.msra.mxu0 %v1465
        %2175 = vmatpush.bf16.msra.mxu0 %v1459
        %2176 = vmatpush.bf16.msra.mxu0 %v1453
        %2177 = vmatpush.bf16.msra.mxu0 %v1447
        %2178 = vmatpush.bf16.msra.mxu0 %v1441
        %2179 = vmatpush.bf16.msra.mxu0 %v1435
        %2180 = vmatmul.bf16.gmra.mxu0 %v180
        %v2181 = vpop.f32.mrf.mxu0
        %v2182 = vadd.f32 %v2169, %v2181
        %v2183 = vpop.f32.mrf.mxu0
        %2184 = vdwg.mxu0
        %2185 = vmatpush.bf16.msra.mxu0 %v1525
        %2186 = vmatpush.bf16.msra.mxu0 %v1519
        %2187 = vmatpush.bf16.msra.mxu0 %v1513
        %2188 = vmatpush.bf16.msra.mxu0 %v1507
        %2189 = vmatpush.bf16.msra.mxu0 %v1501
        %2190 = vmatpush.bf16.msra.mxu0 %v1495
        %2191 = vmatpush.bf16.msra.mxu0 %v1489
        %2192 = vmatpush.bf16.msra.mxu0 %v1483
        %2193 = vmatmul.bf16.gmra.mxu0 %v181
        %v2194 = vpop.f32.mrf.mxu0
        %v2195 = vadd.f32 %v2182, %v2194
        %v2196 = vpop.f32.mrf.mxu0
        %2197 = vdwg.mxu0
        %2198 = vmatpush.bf16.msra.mxu0 %v1573
        %2199 = vmatpush.bf16.msra.mxu0 %v1567
        %2200 = vmatpush.bf16.msra.mxu0 %v1561
        %2201 = vmatpush.bf16.msra.mxu0 %v1555
        %2202 = vmatpush.bf16.msra.mxu0 %v1549
        %2203 = vmatpush.bf16.msra.mxu0 %v1543
        %2204 = vmatpush.bf16.msra.mxu0 %v1537
        %2205 = vmatpush.bf16.msra.mxu0 %v1531
        %2206 = vmatmul.bf16.gmra.mxu0 %v182
        %v2207 = vpop.f32.mrf.mxu0
        %v2208 = vadd.f32 %v2195, %v2207
        %v2209 = vpop.f32.mrf.mxu0
        %2210 = vdwg.mxu0
        %2211 = vmatpush.bf16.msra.mxu0 %v1621
        %2212 = vmatpush.bf16.msra.mxu0 %v1615
        %2213 = vmatpush.bf16.msra.mxu0 %v1609
        %2214 = vmatpush.bf16.msra.mxu0 %v1603
        %2215 = vmatpush.bf16.msra.mxu0 %v1597
        %2216 = vmatpush.bf16.msra.mxu0 %v1591
        %2217 = vmatpush.bf16.msra.mxu0 %v1585
        %2218 = vmatpush.bf16.msra.mxu0 %v1579
        %2219 = vmatmul.bf16.gmra.mxu0 %v183
        %v2220 = vpop.f32.mrf.mxu0
        %v2221 = vadd.f32 %v2208, %v2220
        %v2222 = vpop.f32.mrf.mxu0
        %2223 = vdwg.mxu0
        %2224 = vmatpush.bf16.msra.mxu0 %v1382
        %2225 = vmatpush.bf16.msra.mxu0 %v1376
        %2226 = vmatpush.bf16.msra.mxu0 %v1370
        %2227 = vmatpush.bf16.msra.mxu0 %v1364
        %2228 = vmatpush.bf16.msra.mxu0 %v1358
        %2229 = vmatpush.bf16.msra.mxu0 %v1352
        %2230 = vmatpush.bf16.msra.mxu0 %v1346
        %2231 = vmatpush.bf16.msra.mxu0 %v1340
        %2232 = vmatmul.bf16.gmra.mxu0 %v178
        %v2233 = vpop.f32.mrf.mxu0
        %v2234 = vadd.f32 0.0, %v2233
        %v2235 = vpop.f32.mrf.mxu0
        %2236 = vdwg.mxu0
        %2237 = vmatpush.bf16.msra.mxu0 %v1430
        %2238 = vmatpush.bf16.msra.mxu0 %v1424
        %2239 = vmatpush.bf16.msra.mxu0 %v1418
        %2240 = vmatpush.bf16.msra.mxu0 %v1412
        %2241 = vmatpush.bf16.msra.mxu0 %v1406
        %2242 = vmatpush.bf16.msra.mxu0 %v1400
        %2243 = vmatpush.bf16.msra.mxu0 %v1394
        %2244 = vmatpush.bf16.msra.mxu0 %v1388
        %2245 = vmatmul.bf16.gmra.mxu0 %v179
        %v2246 = vpop.f32.mrf.mxu0
        %v2247 = vadd.f32 %v2234, %v2246
        %v2248 = vpop.f32.mrf.mxu0
        %2249 = vdwg.mxu0
        %2250 = vmatpush.bf16.msra.mxu0 %v1478
        %2251 = vmatpush.bf16.msra.mxu0 %v1472
        %2252 = vmatpush.bf16.msra.mxu0 %v1466
        %2253 = vmatpush.bf16.msra.mxu0 %v1460
        %2254 = vmatpush.bf16.msra.mxu0 %v1454
        %2255 = vmatpush.bf16.msra.mxu0 %v1448
        %2256 = vmatpush.bf16.msra.mxu0 %v1442
        %2257 = vmatpush.bf16.msra.mxu0 %v1436
        %2258 = vmatmul.bf16.gmra.mxu0 %v180
        %v2259 = vpop.f32.mrf.mxu0
        %v2260 = vadd.f32 %v2247, %v2259
        %v2261 = vpop.f32.mrf.mxu0
        %2262 = vdwg.mxu0
        %2263 = vmatpush.bf16.msra.mxu0 %v1526
        %2264 = vmatpush.bf16.msra.mxu0 %v1520
        %2265 = vmatpush.bf16.msra.mxu0 %v1514
        %2266 = vmatpush.bf16.msra.mxu0 %v1508
        %2267 = vmatpush.bf16.msra.mxu0 %v1502
        %2268 = vmatpush.bf16.msra.mxu0 %v1496
        %2269 = vmatpush.bf16.msra.mxu0 %v1490
        %2270 = vmatpush.bf16.msra.mxu0 %v1484
        %2271 = vmatmul.bf16.gmra.mxu0 %v181
        %v2272 = vpop.f32.mrf.mxu0
        %v2273 = vadd.f32 %v2260, %v2272
        %v2274 = vpop.f32.mrf.mxu0
        %2275 = vdwg.mxu0
        %2276 = vmatpush.bf16.msra.mxu0 %v1574
        %2277 = vmatpush.bf16.msra.mxu0 %v1568
        %2278 = vmatpush.bf16.msra.mxu0 %v1562
        %2279 = vmatpush.bf16.msra.mxu0 %v1556
        %2280 = vmatpush.bf16.msra.mxu0 %v1550
        %2281 = vmatpush.bf16.msra.mxu0 %v1544
        %2282 = vmatpush.bf16.msra.mxu0 %v1538
        %2283 = vmatpush.bf16.msra.mxu0 %v1532
        %2284 = vmatmul.bf16.gmra.mxu0 %v182
        %v2285 = vpop.f32.mrf.mxu0
        %v2286 = vadd.f32 %v2273, %v2285
        %v2287 = vpop.f32.mrf.mxu0
        %2288 = vdwg.mxu0
        %2289 = vmatpush.bf16.msra.mxu0 %v1622
        %2290 = vmatpush.bf16.msra.mxu0 %v1616
        %2291 = vmatpush.bf16.msra.mxu0 %v1610
        %2292 = vmatpush.bf16.msra.mxu0 %v1604
        %2293 = vmatpush.bf16.msra.mxu0 %v1598
        %2294 = vmatpush.bf16.msra.mxu0 %v1592
        %2295 = vmatpush.bf16.msra.mxu0 %v1586
        %2296 = vmatpush.bf16.msra.mxu0 %v1580
        %2297 = vmatmul.bf16.gmra.mxu0 %v183
        %v2298 = vpop.f32.mrf.mxu0
        %v2299 = vadd.f32 %v2286, %v2298
        %v2300 = vpop.f32.mrf.mxu0
        %2301 = vdwg.mxu0
        %2302 = vmatpush.bf16.msra.mxu0 %v1383
        %2303 = vmatpush.bf16.msra.mxu0 %v1377
        %2304 = vmatpush.bf16.msra.mxu0 %v1371
        %2305 = vmatpush.bf16.msra.mxu0 %v1365
        %2306 = vmatpush.bf16.msra.mxu0 %v1359
        %2307 = vmatpush.bf16.msra.mxu0 %v1353
        %2308 = vmatpush.bf16.msra.mxu0 %v1347
        %2309 = vmatpush.bf16.msra.mxu0 %v1341
        %2310 = vmatmul.bf16.gmra.mxu0 %v178
        %v2311 = vpop.f32.mrf.mxu0
        %v2312 = vadd.f32 0.0, %v2311
        %v2313 = vpop.f32.mrf.mxu0
        %2314 = vdwg.mxu0
        %2315 = vmatpush.bf16.msra.mxu0 %v1431
        %2316 = vmatpush.bf16.msra.mxu0 %v1425
        %2317 = vmatpush.bf16.msra.mxu0 %v1419
        %2318 = vmatpush.bf16.msra.mxu0 %v1413
        %2319 = vmatpush.bf16.msra.mxu0 %v1407
        %2320 = vmatpush.bf16.msra.mxu0 %v1401
        %2321 = vmatpush.bf16.msra.mxu0 %v1395
        %2322 = vmatpush.bf16.msra.mxu0 %v1389
        %2323 = vmatmul.bf16.gmra.mxu0 %v179
        %v2324 = vpop.f32.mrf.mxu0
        %v2325 = vadd.f32 %v2312, %v2324
        %v2326 = vpop.f32.mrf.mxu0
        %2327 = vdwg.mxu0
        %2328 = vmatpush.bf16.msra.mxu0 %v1479
        %2329 = vmatpush.bf16.msra.mxu0 %v1473
        %2330 = vmatpush.bf16.msra.mxu0 %v1467
        %2331 = vmatpush.bf16.msra.mxu0 %v1461
        %2332 = vmatpush.bf16.msra.mxu0 %v1455
        %2333 = vmatpush.bf16.msra.mxu0 %v1449
        %2334 = vmatpush.bf16.msra.mxu0 %v1443
        %2335 = vmatpush.bf16.msra.mxu0 %v1437
        %2336 = vmatmul.bf16.gmra.mxu0 %v180
        %v2337 = vpop.f32.mrf.mxu0
        %v2338 = vadd.f32 %v2325, %v2337
        %v2339 = vpop.f32.mrf.mxu0
        %2340 = vdwg.mxu0
        %2341 = vmatpush.bf16.msra.mxu0 %v1527
        %2342 = vmatpush.bf16.msra.mxu0 %v1521
        %2343 = vmatpush.bf16.msra.mxu0 %v1515
        %2344 = vmatpush.bf16.msra.mxu0 %v1509
        %2345 = vmatpush.bf16.msra.mxu0 %v1503
        %2346 = vmatpush.bf16.msra.mxu0 %v1497
        %2347 = vmatpush.bf16.msra.mxu0 %v1491
        %2348 = vmatpush.bf16.msra.mxu0 %v1485
        %2349 = vmatmul.bf16.gmra.mxu0 %v181
        %v2350 = vpop.f32.mrf.mxu0
        %v2351 = vadd.f32 %v2338, %v2350
        %v2352 = vpop.f32.mrf.mxu0
        %2353 = vdwg.mxu0
        %2354 = vmatpush.bf16.msra.mxu0 %v1575
        %2355 = vmatpush.bf16.msra.mxu0 %v1569
        %2356 = vmatpush.bf16.msra.mxu0 %v1563
        %2357 = vmatpush.bf16.msra.mxu0 %v1557
        %2358 = vmatpush.bf16.msra.mxu0 %v1551
        %2359 = vmatpush.bf16.msra.mxu0 %v1545
        %2360 = vmatpush.bf16.msra.mxu0 %v1539
        %2361 = vmatpush.bf16.msra.mxu0 %v1533
        %2362 = vmatmul.bf16.gmra.mxu0 %v182
        %v2363 = vpop.f32.mrf.mxu0
        %v2364 = vadd.f32 %v2351, %v2363
        %v2365 = vpop.f32.mrf.mxu0
        %2366 = vdwg.mxu0
        %2367 = vmatpush.bf16.msra.mxu0 %v1623
        %2368 = vmatpush.bf16.msra.mxu0 %v1617
        %2369 = vmatpush.bf16.msra.mxu0 %v1611
        %2370 = vmatpush.bf16.msra.mxu0 %v1605
        %2371 = vmatpush.bf16.msra.mxu0 %v1599
        %2372 = vmatpush.bf16.msra.mxu0 %v1593
        %2373 = vmatpush.bf16.msra.mxu0 %v1587
        %2374 = vmatpush.bf16.msra.mxu0 %v1581
        %2375 = vmatmul.bf16.gmra.mxu0 %v183
        %v2376 = vpop.f32.mrf.mxu0
        %v2377 = vadd.f32 %v2364, %v2376
        %v2378 = vpop.f32.mrf.mxu0
        %2379 = vdwg.mxu0
        %vm2380 = vcmp.ge.f32.partialorder %v1987, 0.0
        %vm2381 = vcmp.ge.f32.partialorder %v2065, 0.0
        %vm2382 = vcmp.ge.f32.partialorder %v2143, 0.0
        %vm2383 = vcmp.ge.f32.partialorder %v2221, 0.0
        %vm2384 = vcmp.ge.f32.partialorder %v2299, 0.0
        %vm2385 = vcmp.ge.f32.partialorder %v2377, 0.0
        %v2386 = vmul.f32 %v1987, 0.01
        %v2387 = vmul.f32 %v2065, 0.01
        %v2388 = vmul.f32 %v2143, 0.01
        %v2389 = vmul.f32 %v2221, 0.01
        %v2390 = vmul.f32 %v2299, 0.01
        %v2391 = vmul.f32 %v2377, 0.01
        %v2392 = vsel %vm2380, %v1987, %v2386
        %v2393 = vsel %vm2381, %v2065, %v2387
        %v2394 = vsel %vm2382, %v2143, %v2388
        %v2395 = vsel %vm2383, %v2221, %v2389
        %v2396 = vsel %vm2384, %v2299, %v2390
        %v2397 = vsel %vm2385, %v2377, %v2391
        %v2404 = vrot.slane %v2393, 6
        %v2405 = vrot.slane %v2394, 4
        %v2406 = vrot.slane %v2395, 2
        %v2407 = vrot.slane %v2397, 6
        %vm2408 = vcmask 1041408
        %v2409 = vsel %vm2408, %v2392, %v2404
        %vm2410 = vcmask 1045508
        %v2411 = vsel %vm2410, %v2405, %v2406
        %vm2412 = vcmask 1043456
        %v2413 = vsel %vm2412, %v2409, %v2411
        %v2414 = vsel %vm2408, %v2396, %v2407
        %2417 = vst [vmem:[#allocation2] sm:$0xff] %v2413
        %2418 = vst [vmem:[#allocation2 + $0x8] sm:$0xf] %v2414
        %2419 = vst [vmem:[%s2] sm:$0xff] %v2413
        %2420 = vst [vmem:[%s2 + $0x8] sm:$0xf] %v2414
        // Predicated region
        $region37: #{apply_fourier_layers.1} parent=27 // pred_check
          %p2421 = pneg %p76
        $region38: #{apply_fourier_layers.1} parent=27 // pred_check_branch
          %2423 = sbr.rel (%p2421) target = $region40
        $region39: #{apply_fourier_layers.1} parent=27 // pred_region
          _
        $region40: #{apply_fourier_layers.1} parent=27 // pred_fallthru
          _
        // Predicated region
        $region41: #{apply_fourier_layers.1} parent=27 // pred_check
          %p2424 = pneg %p76
        $region42: #{apply_fourier_layers.1} parent=27 // pred_check_branch
          %2426 = sbr.rel (%p2424) target = $region44
        $region43: #{apply_fourier_layers.1} parent=27 // pred_region
          _
        $region44: #{apply_fourier_layers.1} parent=27 // pred_fallthru
          _
      $region28: #{apply_fourier_layers.1} parent=5 // pred_fallthru
        _
      %p2427 = scmp.le.s32.totalorder 2, %s11
      // Predicated region
      $region45: #{apply_fourier_layers.1} parent=5 // pred_check
        %p2428 = pneg %p2427
      $region46: #{apply_fourier_layers.1} parent=5 // pred_check_branch
        %2430 = sbr.rel (%p2428) target = $region48
      $region47: #{apply_fourier_layers.1} parent=5 // pred_region
        %s2431 = ssub.s32 %s11, 2
      $region48: #{apply_fourier_layers.1} parent=5 // pred_fallthru
        _
    $region6: #{apply_fourier_layers.1} parent=1 // loop_footer
      %s15 = sadd.s32 1, %s11
    $region7: #{apply_fourier_layers.1} parent=1 // loop_footer_branch
      %10 = sbr.rel target = $region3
    $region8: #{apply_fourier_layers.1} parent=1 // loop_exit
      _
    %2432 = vsyncpa [#allocation4], 1
    %s2433 = scalar_lea.sflag [#allocation4], 1
    %2434 = vsyncpa %s2433, 1

</llo_original>
